<compile_context>
chip_gen: v6e
topology: v6e:2x2x1
jax: 0.10.0
libtpu: 0.0.40
codegen_flags: <defaults>
</compile_context>

<pallas_src>
import math

import jax
import jax.numpy as jnp
from jax import lax
from jax.experimental import pallas as pl
from jax.experimental.pallas import tpu as pltpu  # noqa: F401  (kept for completeness)

# ---- small, module-consistent sizes ----
BATCH = 2
SEQ = 8
D_MODEL = 32
HEADS = 4
D_FF = 64
D_K = D_MODEL // HEADS
EPS = 1e-6
VEC_W = 3 * D_MODEL  # packed-params row width (>= 3*D_MODEL and >= D_FF)


def encoder_layer_kernel(x_ref, rowmask_ref, wqkv_ref, wo_ref, w1_ref, w2_ref, vec_ref, o_ref):
    x = x_ref[...]                       # (B*S, D) f32
    rm = rowmask_ref[...]                # (B*S, 1) f32; 1.0 => query row fully masked
    vec = vec_ref[...]                   # (8, 3D) packed small params

    alpha1 = vec[0:1, 0:D_MODEL]
    beta1 = vec[1:2, 0:D_MODEL]
    alpha2 = vec[2:3, 0:D_MODEL]
    beta2 = vec[3:4, 0:D_MODEL]
    bqkv = vec[4:5, 0:3 * D_MODEL]
    bo = vec[5:6, 0:D_MODEL]
    b1 = vec[6:7, 0:D_FF]
    b2 = vec[7:8, 0:D_MODEL]

    def layer_norm(v, alpha, beta):
        mean = jnp.mean(v, axis=-1, keepdims=True)
        # torch.std default is unbiased (divide by N-1)
        var = jnp.sum((v - mean) ** 2, axis=-1, keepdims=True) / (v.shape[-1] - 1)
        std = jnp.sqrt(var)
        return alpha * (v - mean) / (std + EPS) + beta

    # ---- sublayer 1: pre-norm + fused-QKV multi-head self-attention + residual ----
    x2 = layer_norm(x, alpha1, beta1)
    qkv = jnp.dot(x2, wqkv_ref[...], preferred_element_type=jnp.float32) + bqkv   # (B*S, 3D)
    q = qkv[:, 0:D_MODEL]
    k = qkv[:, D_MODEL:2 * D_MODEL]
    v = qkv[:, 2 * D_MODEL:3 * D_MODEL]

    wo = wo_ref[...]
    inv_sqrt_dk = 1.0 / math.sqrt(D_K)

    attn_rows = []
    for b in range(BATCH):                      # static unroll: per-batch attention block
        r0 = b * SEQ
        qb = q[r0:r0 + SEQ, :]
        kb = k[r0:r0 + SEQ, :]
        vb = v[r0:r0 + SEQ, :]
        masked_b = rm[r0:r0 + SEQ, :] > 0.5     # (SEQ, 1)
        acc = jnp.zeros((SEQ, D_MODEL), jnp.float32)
        for h in range(HEADS):                  # static unroll over heads
            c0 = h * D_K
            qh = qb[:, c0:c0 + D_K]
            kh = kb[:, c0:c0 + D_K]
            vh = vb[:, c0:c0 + D_K]
            # contract last dim of both operands -> no explicit XLU transpose
            s = lax.dot_general(qh, kh, (((1,), (1,)), ((), ())),
                                preferred_element_type=jnp.float32) * inv_sqrt_dk  # (SEQ, SEQ)
            # query row i fully masked iff sum(mask[b, i, :]) == 0 (reference semantics)
            s = jnp.where(masked_b, -1000000000.0, s)
            s = s - jnp.max(s, axis=-1, keepdims=True)
            p = jnp.exp(s)
            p = p * pl.reciprocal(jnp.sum(p, axis=-1, keepdims=True), approx=True)
            pv = jnp.dot(p, vh, preferred_element_type=jnp.float32)                # (SEQ, D_K)
            # fold the head-concat into per-head accumulation against W_o row-slices
            acc = acc + jnp.dot(pv, wo[c0:c0 + D_K, :], preferred_element_type=jnp.float32)
        attn_rows.append(acc)
    attn_out = jnp.concatenate(attn_rows, axis=0) + bo                              # (B*S, D)

    x = x + attn_out  # dropout_1 is identity in eval mode

    # ---- sublayer 2: pre-norm + feed-forward + residual ----
    x2 = layer_norm(x, alpha2, beta2)
    hdd = jnp.maximum(jnp.dot(x2, w1_ref[...], preferred_element_type=jnp.float32) + b1, 0.0)
    ff = jnp.dot(hdd, w2_ref[...], preferred_element_type=jnp.float32) + b2
    o_ref[...] = (x + ff).astype(o_ref.dtype)  # dropout_2 is identity in eval mode


def encoder_layer(x, mask, params):
    (alpha1, beta1, wq, bq, wk, bk, wv, bv, wo, bo,
     alpha2, beta2, w1, b1, w2, b2) = params

    B, S, D = x.shape
    x_flat = x.reshape(B * S, D)

    # Host-side (free in XLA): row i of batch b is fully masked iff sum(mask[b,i,:]) == 0
    row_masked = (jnp.sum(mask, axis=-1) == 0.0).astype(jnp.float32).reshape(B * S, 1)

    # Fused QKV weights / biases
    wqkv = jnp.concatenate([wq, wk, wv], axis=1)   # (D, 3D)
    bqkv = jnp.concatenate([bq, bk, bv], axis=1)   # (1, 3D)

    # Pack all tiny per-feature params into one (8, VEC_W) array (one row each).
    def pad_row(v):
        return jnp.pad(v, ((0, 0), (0, VEC_W - v.shape[1])))

    vec = jnp.concatenate([
        pad_row(alpha1), pad_row(beta1), pad_row(alpha2), pad_row(beta2),
        bqkv, pad_row(bo), pad_row(b1), pad_row(b2),
    ], axis=0)  # (8, 96)

    in_specs = [
        pl.BlockSpec((B * S, D), lambda i: (0, 0)),          # x (flattened)
        pl.BlockSpec((B * S, 1), lambda i: (0, 0)),          # row mask flag
        pl.BlockSpec((D, 3 * D), lambda i: (0, 0)),          # wqkv
        pl.BlockSpec((D, D), lambda i: (0, 0)),              # wo
        pl.BlockSpec((D, D_FF), lambda i: (0, 0)),           # w1
        pl.BlockSpec((D_FF, D), lambda i: (0, 0)),           # w2
        pl.BlockSpec((8, VEC_W), lambda i: (0, 0)),          # packed small params
    ]

    out_flat = pl.pallas_call(
        encoder_layer_kernel,
        out_shape=jax.ShapeDtypeStruct((B * S, D), jnp.float32),
        grid=(1,),                                           # single invocation (grid collapsed)
        in_specs=in_specs,
        out_specs=pl.BlockSpec((B * S, D), lambda i: (0, 0)),
    )(x_flat, row_masked, wqkv, wo, w1, w2, vec)

    return out_flat.reshape(B, S, D)


def reference(x, mask, params):
    """Pure-JAX mirror of the PyTorch forward (eval mode) for verification."""
    (alpha1, beta1, wq, bq, wk, bk, wv, bv, wo, bo,
     alpha2, beta2, w1, b1, w2, b2) = params

    def norm(v, a, b):
        mean = jnp.mean(v, axis=-1, keepdims=True)
        std = jnp.sqrt(jnp.sum((v - mean) ** 2, axis=-1, keepdims=True) / (v.shape[-1] - 1))
        return a[0] * (v - mean) / (std + EPS) + b[0]

    x2 = norm(x, alpha1, beta1)
    q = x2 @ wq + bq[0]
    k = x2 @ wk + bk[0]
    v = x2 @ wv + bv[0]
    q = q.reshape(BATCH, SEQ, HEADS, D_K).transpose(0, 2, 1, 3)
    k = k.reshape(BATCH, SEQ, HEADS, D_K).transpose(0, 2, 1, 3)
    v = v.reshape(BATCH, SEQ, HEADS, D_K).transpose(0, 2, 1, 3)
    scores = jnp.einsum('bhqd,bhkd->bhqk', q, k) / math.sqrt(D_K)
    row_masked = (jnp.sum(mask, axis=-1) == 0.0)[:, None, :, None]   # (B,1,S,1)
    scores = jnp.where(row_masked, -1000000000.0, scores)
    scores = jax.nn.softmax(scores, axis=-1)
    attn = jnp.einsum('bhqk,bhkd->bhqd', scores, v)
    concat = attn.transpose(0, 2, 1, 3).reshape(BATCH, SEQ, D_MODEL)
    x = x + (concat @ wo + bo[0])
    x2 = norm(x, alpha2, beta2)
    ff = jnp.maximum(x2 @ w1 + b1[0], 0.0) @ w2 + b2[0]
    return x + ff


def init_params(key):
    ks = jax.random.split(key, 10)
    scale = 0.05

    def lin(k, din, dout):
        kw, kb = jax.random.split(k)
        w = jax.random.normal(kw, (din, dout), jnp.float32) * scale
        b = jax.random.normal(kb, (1, dout), jnp.float32) * scale
        return w, b

    alpha1 = jnp.ones((1, D_MODEL), jnp.float32)
    beta1 = jnp.zeros((1, D_MODEL), jnp.float32)
    alpha2 = jnp.ones((1, D_MODEL), jnp.float32)
    beta2 = jnp.zeros((1, D_MODEL), jnp.float32)
    wq, bq = lin(ks[0], D_MODEL, D_MODEL)
    wk, bk = lin(ks[1], D_MODEL, D_MODEL)
    wv, bv = lin(ks[2], D_MODEL, D_MODEL)
    wo, bo = lin(ks[3], D_MODEL, D_MODEL)
    w1, b1 = lin(ks[4], D_MODEL, D_FF)
    w2, b2 = lin(ks[5], D_FF, D_MODEL)
    return (alpha1, beta1, wq, bq, wk, bk, wv, bv, wo, bo,
            alpha2, beta2, w1, b1, w2, b2)


if __name__ == "__main__":
    key = jax.random.PRNGKey(0)
    kx, kp = jax.random.split(key)
    x = jax.random.normal(kx, (BATCH, SEQ, D_MODEL), jnp.float32)

    # mask of shape (batch, seq, seq); zero out the last 2 query rows of batch 1
    mask = jnp.ones((BATCH, SEQ, SEQ), jnp.float32)
    mask = mask.at[1, SEQ - 2:, :].set(0.0)

    params = init_params(kp)

    out = encoder_layer(x, mask, params)
    out = jax.block_until_ready(out)

    ref = reference(x, mask, params)
    assert out.shape == (BATCH, SEQ, D_MODEL)
    # tolerance 1e-3 to absorb the approximate-EUP softmax reciprocal (exact math elsewhere)
    assert jnp.allclose(out, ref, atol=1e-3, rtol=1e-3), "mismatch vs pure-JAX reference"

    print("KERNEL_OK")
</pallas_src>

<mosaic_0001>
module attributes {stable_mosaic.version = 11 : i64} {
  func.func @encoder_layer_kernel(%arg0: i32, %arg1: memref<16x32xf32, #tpu.memory_space<vmem>>, %arg2: memref<16x1xf32, #tpu.memory_space<vmem>>, %arg3: memref<32x96xf32, #tpu.memory_space<vmem>>, %arg4: memref<32x32xf32, #tpu.memory_space<vmem>>, %arg5: memref<32x64xf32, #tpu.memory_space<vmem>>, %arg6: memref<64x32xf32, #tpu.memory_space<vmem>>, %arg7: memref<8x96xf32, #tpu.memory_space<vmem>>, %arg8: memref<16x32xf32, #tpu.memory_space<vmem>>) attributes {dimension_semantics = [#tpu.dimension_semantics<arbitrary>], iteration_bounds = array<i64: 1>, scalar_prefetch = 0 : i64, scratch_operands = 0 : i64, tpu.core_type = #tpu.core_type<tc>, window_params = [{pipeline_mode = #tpu.pipeline_mode<synchronous>, transform_indices = @transform_0, window_bounds = array<i64: 16, 32>}, {pipeline_mode = #tpu.pipeline_mode<synchronous>, transform_indices = @transform_1, window_bounds = array<i64: 16, 1>}, {pipeline_mode = #tpu.pipeline_mode<synchronous>, transform_indices = @transform_2, window_bounds = array<i64: 32, 96>}, {pipeline_mode = #tpu.pipeline_mode<synchronous>, transform_indices = @transform_3, window_bounds = array<i64: 32, 32>}, {pipeline_mode = #tpu.pipeline_mode<synchronous>, transform_indices = @transform_4, window_bounds = array<i64: 32, 64>}, {pipeline_mode = #tpu.pipeline_mode<synchronous>, transform_indices = @transform_5, window_bounds = array<i64: 64, 32>}, {pipeline_mode = #tpu.pipeline_mode<synchronous>, transform_indices = @transform_6, window_bounds = array<i64: 8, 96>}, {pipeline_mode = #tpu.pipeline_mode<synchronous>, transform_indices = @transform_7, window_bounds = array<i64: 16, 32>}]} {
    %c0 = arith.constant 0 : index
    %c0_0 = arith.constant 0 : index
    %0 = vector.load %arg1[%c0, %c0_0] : memref<16x32xf32, #tpu.memory_space<vmem>>, vector<16x32xf32>
    %c0_1 = arith.constant 0 : index
    %c0_2 = arith.constant 0 : index
    %1 = vector.load %arg2[%c0_1, %c0_2] : memref<16x1xf32, #tpu.memory_space<vmem>>, vector<16x1xf32>
    %c0_3 = arith.constant 0 : index
    %c0_4 = arith.constant 0 : index
    %2 = vector.load %arg7[%c0_3, %c0_4] : memref<8x96xf32, #tpu.memory_space<vmem>>, vector<8x96xf32>
    %3 = vector.extract_strided_slice %2 {offsets = [0, 0], sizes = [1, 32], strides = [1, 1]} : vector<8x96xf32> to vector<1x32xf32>
    %4 = vector.extract_strided_slice %2 {offsets = [1, 0], sizes = [1, 32], strides = [1, 1]} : vector<8x96xf32> to vector<1x32xf32>
    %5 = vector.extract_strided_slice %2 {offsets = [2, 0], sizes = [1, 32], strides = [1, 1]} : vector<8x96xf32> to vector<1x32xf32>
    %6 = vector.extract_strided_slice %2 {offsets = [3, 0], sizes = [1, 32], strides = [1, 1]} : vector<8x96xf32> to vector<1x32xf32>
    %7 = vector.extract_strided_slice %2 {offsets = [4, 0], sizes = [1, 96], strides = [1, 1]} : vector<8x96xf32> to vector<1x96xf32>
    %8 = vector.extract_strided_slice %2 {offsets = [5, 0], sizes = [1, 32], strides = [1, 1]} : vector<8x96xf32> to vector<1x32xf32>
    %9 = vector.extract_strided_slice %2 {offsets = [6, 0], sizes = [1, 64], strides = [1, 1]} : vector<8x96xf32> to vector<1x64xf32>
    %10 = vector.extract_strided_slice %2 {offsets = [7, 0], sizes = [1, 32], strides = [1, 1]} : vector<8x96xf32> to vector<1x32xf32>
    %cst = arith.constant dense<0.000000e+00> : vector<16xf32>
    %11 = vector.multi_reduction <add>, %0, %cst [1] : vector<16x32xf32> to vector<16xf32>
    %12 = vector.shape_cast %11 : vector<16xf32> to vector<16x1xf32>
    %cst_5 = arith.constant 3.200000e+01 : f32
    %13 = vector.broadcast %cst_5 : f32 to vector<16x1xf32>
    %14 = arith.divf %12, %13 : vector<16x1xf32>
    %15 = vector.broadcast %14 : vector<16x1xf32> to vector<16x32xf32>
    %16 = arith.subf %0, %15 : vector<16x32xf32>
    %17 = arith.mulf %16, %16 : vector<16x32xf32>
    %cst_6 = arith.constant dense<0.000000e+00> : vector<16xf32>
    %18 = vector.multi_reduction <add>, %17, %cst_6 [1] : vector<16x32xf32> to vector<16xf32>
    %19 = vector.shape_cast %18 : vector<16xf32> to vector<16x1xf32>
    %cst_7 = arith.constant 3.100000e+01 : f32
    %20 = vector.broadcast %cst_7 : f32 to vector<16x1xf32>
    %21 = arith.divf %19, %20 : vector<16x1xf32>
    %22 = math.sqrt %21 : vector<16x1xf32>
    %23 = vector.broadcast %14 : vector<16x1xf32> to vector<16x32xf32>
    %24 = arith.subf %0, %23 : vector<16x32xf32>
    %25 = vector.broadcast %3 : vector<1x32xf32> to vector<16x32xf32>
    %26 = arith.mulf %25, %24 : vector<16x32xf32>
    %cst_8 = arith.constant 9.99999997E-7 : f32
    %27 = vector.broadcast %cst_8 : f32 to vector<16x1xf32>
    %28 = arith.addf %22, %27 : vector<16x1xf32>
    %29 = vector.broadcast %28 : vector<16x1xf32> to vector<16x32xf32>
    %30 = arith.divf %26, %29 : vector<16x32xf32>
    %31 = vector.broadcast %4 : vector<1x32xf32> to vector<16x32xf32>
    %32 = arith.addf %30, %31 : vector<16x32xf32>
    %c0_9 = arith.constant 0 : index
    %c0_10 = arith.constant 0 : index
    %33 = vector.load %arg3[%c0_9, %c0_10] : memref<32x96xf32, #tpu.memory_space<vmem>>, vector<32x96xf32>
    %cst_11 = arith.constant dense<0.000000e+00> : vector<16x96xf32>
    %34 = tpu.matmul %32, %33, %cst_11 {dimension_numbers = #tpu.dot_dimension_numbers<[1], [0], [0], [1], [0, 0, 1, 1], [], []>} : vector<16x32xf32>, vector<32x96xf32>, vector<16x96xf32> -> vector<16x96xf32>
    %35 = vector.broadcast %7 : vector<1x96xf32> to vector<16x96xf32>
    %36 = arith.addf %34, %35 : vector<16x96xf32>
    %37 = vector.extract_strided_slice %36 {offsets = [0, 0], sizes = [16, 32], strides = [1, 1]} : vector<16x96xf32> to vector<16x32xf32>
    %38 = vector.extract_strided_slice %36 {offsets = [0, 32], sizes = [16, 32], strides = [1, 1]} : vector<16x96xf32> to vector<16x32xf32>
    %39 = vector.extract_strided_slice %36 {offsets = [0, 64], sizes = [16, 32], strides = [1, 1]} : vector<16x96xf32> to vector<16x32xf32>
    %c0_12 = arith.constant 0 : index
    %c0_13 = arith.constant 0 : index
    %40 = vector.load %arg4[%c0_12, %c0_13] : memref<32x32xf32, #tpu.memory_space<vmem>>, vector<32x32xf32>
    %41 = vector.extract_strided_slice %37 {offsets = [0, 0], sizes = [8, 32], strides = [1, 1]} : vector<16x32xf32> to vector<8x32xf32>
    %42 = vector.extract_strided_slice %38 {offsets = [0, 0], sizes = [8, 32], strides = [1, 1]} : vector<16x32xf32> to vector<8x32xf32>
    %43 = vector.extract_strided_slice %39 {offsets = [0, 0], sizes = [8, 32], strides = [1, 1]} : vector<16x32xf32> to vector<8x32xf32>
    %44 = vector.extract_strided_slice %1 {offsets = [0, 0], sizes = [8, 1], strides = [1, 1]} : vector<16x1xf32> to vector<8x1xf32>
    %cst_14 = arith.constant 5.000000e-01 : f32
    %45 = vector.broadcast %cst_14 : f32 to vector<8x1xf32>
    %46 = arith.cmpf ogt, %44, %45 : vector<8x1xf32>
    %cst_15 = arith.constant 0.000000e+00 : f32
    %47 = vector.broadcast %cst_15 : f32 to vector<8x32xf32>
    %48 = vector.extract_strided_slice %41 {offsets = [0, 0], sizes = [8, 8], strides = [1, 1]} : vector<8x32xf32> to vector<8x8xf32>
    %49 = vector.extract_strided_slice %42 {offsets = [0, 0], sizes = [8, 8], strides = [1, 1]} : vector<8x32xf32> to vector<8x8xf32>
    %50 = vector.extract_strided_slice %43 {offsets = [0, 0], sizes = [8, 8], strides = [1, 1]} : vector<8x32xf32> to vector<8x8xf32>
    %cst_16 = arith.constant dense<0.000000e+00> : vector<8x8xf32>
    %51 = tpu.matmul %48, %49, %cst_16 {dimension_numbers = #tpu.dot_dimension_numbers<[1], [1], [0], [0], [0, 0, 1, 0], [], []>} : vector<8x8xf32>, vector<8x8xf32>, vector<8x8xf32> -> vector<8x8xf32>
    %cst_17 = arith.constant 0.353553385 : f32
    %52 = vector.broadcast %cst_17 : f32 to vector<8x8xf32>
    %53 = arith.mulf %51, %52 : vector<8x8xf32>
    %cst_18 = arith.constant -1.000000e+09 : f32
    %54 = vector.shape_cast %46 : vector<8x1xi1> to vector<8x1xi1>
    %55 = vector.broadcast %54 : vector<8x1xi1> to vector<8x8xi1>
    %56 = vector.broadcast %cst_18 : f32 to vector<8x8xf32>
    %57 = arith.select %55, %56, %53 : vector<8x8xi1>, vector<8x8xf32>
    %cst_19 = arith.constant dense<0xFF800000> : vector<8xf32>
    %58 = vector.multi_reduction <maximumf>, %57, %cst_19 [1] : vector<8x8xf32> to vector<8xf32>
    %59 = vector.shape_cast %58 : vector<8xf32> to vector<8x1xf32>
    %60 = vector.broadcast %59 : vector<8x1xf32> to vector<8x8xf32>
    %61 = arith.subf %57, %60 : vector<8x8xf32>
    %62 = math.exp %61 : vector<8x8xf32>
    %cst_20 = arith.constant dense<0.000000e+00> : vector<8xf32>
    %63 = vector.multi_reduction <add>, %62, %cst_20 [1] : vector<8x8xf32> to vector<8xf32>
    %64 = vector.shape_cast %63 : vector<8xf32> to vector<8x1xf32>
    %65 = tpu.reciprocal %64 {approx = true} : vector<8x1xf32> -> vector<8x1xf32>
    %66 = vector.broadcast %65 : vector<8x1xf32> to vector<8x8xf32>
    %67 = arith.mulf %62, %66 : vector<8x8xf32>
    %cst_21 = arith.constant dense<0.000000e+00> : vector<8x8xf32>
    %68 = tpu.matmul %67, %50, %cst_21 {dimension_numbers = #tpu.dot_dimension_numbers<[1], [0], [0], [1], [0, 0, 1, 1], [], []>} : vector<8x8xf32>, vector<8x8xf32>, vector<8x8xf32> -> vector<8x8xf32>
    %69 = vector.extract_strided_slice %40 {offsets = [0, 0], sizes = [8, 32], strides = [1, 1]} : vector<32x32xf32> to vector<8x32xf32>
    %cst_22 = arith.constant dense<0.000000e+00> : vector<8x32xf32>
    %70 = tpu.matmul %68, %69, %cst_22 {dimension_numbers = #tpu.dot_dimension_numbers<[1], [0], [0], [1], [0, 0, 1, 1], [], []>} : vector<8x8xf32>, vector<8x32xf32>, vector<8x32xf32> -> vector<8x32xf32>
    %71 = arith.addf %47, %70 : vector<8x32xf32>
    %72 = vector.extract_strided_slice %41 {offsets = [0, 8], sizes = [8, 8], strides = [1, 1]} : vector<8x32xf32> to vector<8x8xf32>
    %73 = vector.extract_strided_slice %42 {offsets = [0, 8], sizes = [8, 8], strides = [1, 1]} : vector<8x32xf32> to vector<8x8xf32>
    %74 = vector.extract_strided_slice %43 {offsets = [0, 8], sizes = [8, 8], strides = [1, 1]} : vector<8x32xf32> to vector<8x8xf32>
    %cst_23 = arith.constant dense<0.000000e+00> : vector<8x8xf32>
    %75 = tpu.matmul %72, %73, %cst_23 {dimension_numbers = #tpu.dot_dimension_numbers<[1], [1], [0], [0], [0, 0, 1, 0], [], []>} : vector<8x8xf32>, vector<8x8xf32>, vector<8x8xf32> -> vector<8x8xf32>
    %cst_24 = arith.constant 0.353553385 : f32
    %76 = vector.broadcast %cst_24 : f32 to vector<8x8xf32>
    %77 = arith.mulf %75, %76 : vector<8x8xf32>
    %cst_25 = arith.constant -1.000000e+09 : f32
    %78 = vector.shape_cast %46 : vector<8x1xi1> to vector<8x1xi1>
    %79 = vector.broadcast %78 : vector<8x1xi1> to vector<8x8xi1>
    %80 = vector.broadcast %cst_25 : f32 to vector<8x8xf32>
    %81 = arith.select %79, %80, %77 : vector<8x8xi1>, vector<8x8xf32>
    %cst_26 = arith.constant dense<0xFF800000> : vector<8xf32>
    %82 = vector.multi_reduction <maximumf>, %81, %cst_26 [1] : vector<8x8xf32> to vector<8xf32>
    %83 = vector.shape_cast %82 : vector<8xf32> to vector<8x1xf32>
    %84 = vector.broadcast %83 : vector<8x1xf32> to vector<8x8xf32>
    %85 = arith.subf %81, %84 : vector<8x8xf32>
    %86 = math.exp %85 : vector<8x8xf32>
    %cst_27 = arith.constant dense<0.000000e+00> : vector<8xf32>
    %87 = vector.multi_reduction <add>, %86, %cst_27 [1] : vector<8x8xf32> to vector<8xf32>
    %88 = vector.shape_cast %87 : vector<8xf32> to vector<8x1xf32>
    %89 = tpu.reciprocal %88 {approx = true} : vector<8x1xf32> -> vector<8x1xf32>
    %90 = vector.broadcast %89 : vector<8x1xf32> to vector<8x8xf32>
    %91 = arith.mulf %86, %90 : vector<8x8xf32>
    %cst_28 = arith.constant dense<0.000000e+00> : vector<8x8xf32>
    %92 = tpu.matmul %91, %74, %cst_28 {dimension_numbers = #tpu.dot_dimension_numbers<[1], [0], [0], [1], [0, 0, 1, 1], [], []>} : vector<8x8xf32>, vector<8x8xf32>, vector<8x8xf32> -> vector<8x8xf32>
    %93 = vector.extract_strided_slice %40 {offsets = [8, 0], sizes = [8, 32], strides = [1, 1]} : vector<32x32xf32> to vector<8x32xf32>
    %cst_29 = arith.constant dense<0.000000e+00> : vector<8x32xf32>
    %94 = tpu.matmul %92, %93, %cst_29 {dimension_numbers = #tpu.dot_dimension_numbers<[1], [0], [0], [1], [0, 0, 1, 1], [], []>} : vector<8x8xf32>, vector<8x32xf32>, vector<8x32xf32> -> vector<8x32xf32>
    %95 = arith.addf %71, %94 : vector<8x32xf32>
    %96 = vector.extract_strided_slice %41 {offsets = [0, 16], sizes = [8, 8], strides = [1, 1]} : vector<8x32xf32> to vector<8x8xf32>
    %97 = vector.extract_strided_slice %42 {offsets = [0, 16], sizes = [8, 8], strides = [1, 1]} : vector<8x32xf32> to vector<8x8xf32>
    %98 = vector.extract_strided_slice %43 {offsets = [0, 16], sizes = [8, 8], strides = [1, 1]} : vector<8x32xf32> to vector<8x8xf32>
    %cst_30 = arith.constant dense<0.000000e+00> : vector<8x8xf32>
    %99 = tpu.matmul %96, %97, %cst_30 {dimension_numbers = #tpu.dot_dimension_numbers<[1], [1], [0], [0], [0, 0, 1, 0], [], []>} : vector<8x8xf32>, vector<8x8xf32>, vector<8x8xf32> -> vector<8x8xf32>
    %cst_31 = arith.constant 0.353553385 : f32
    %100 = vector.broadcast %cst_31 : f32 to vector<8x8xf32>
    %101 = arith.mulf %99, %100 : vector<8x8xf32>
    %cst_32 = arith.constant -1.000000e+09 : f32
    %102 = vector.shape_cast %46 : vector<8x1xi1> to vector<8x1xi1>
    %103 = vector.broadcast %102 : vector<8x1xi1> to vector<8x8xi1>
    %104 = vector.broadcast %cst_32 : f32 to vector<8x8xf32>
    %105 = arith.select %103, %104, %101 : vector<8x8xi1>, vector<8x8xf32>
    %cst_33 = arith.constant dense<0xFF800000> : vector<8xf32>
    %106 = vector.multi_reduction <maximumf>, %105, %cst_33 [1] : vector<8x8xf32> to vector<8xf32>
    %107 = vector.shape_cast %106 : vector<8xf32> to vector<8x1xf32>
    %108 = vector.broadcast %107 : vector<8x1xf32> to vector<8x8xf32>
    %109 = arith.subf %105, %108 : vector<8x8xf32>
    %110 = math.exp %109 : vector<8x8xf32>
    %cst_34 = arith.constant dense<0.000000e+00> : vector<8xf32>
    %111 = vector.multi_reduction <add>, %110, %cst_34 [1] : vector<8x8xf32> to vector<8xf32>
    %112 = vector.shape_cast %111 : vector<8xf32> to vector<8x1xf32>
    %113 = tpu.reciprocal %112 {approx = true} : vector<8x1xf32> -> vector<8x1xf32>
    %114 = vector.broadcast %113 : vector<8x1xf32> to vector<8x8xf32>
    %115 = arith.mulf %110, %114 : vector<8x8xf32>
    %cst_35 = arith.constant dense<0.000000e+00> : vector<8x8xf32>
    %116 = tpu.matmul %115, %98, %cst_35 {dimension_numbers = #tpu.dot_dimension_numbers<[1], [0], [0], [1], [0, 0, 1, 1], [], []>} : vector<8x8xf32>, vector<8x8xf32>, vector<8x8xf32> -> vector<8x8xf32>
    %117 = vector.extract_strided_slice %40 {offsets = [16, 0], sizes = [8, 32], strides = [1, 1]} : vector<32x32xf32> to vector<8x32xf32>
    %cst_36 = arith.constant dense<0.000000e+00> : vector<8x32xf32>
    %118 = tpu.matmul %116, %117, %cst_36 {dimension_numbers = #tpu.dot_dimension_numbers<[1], [0], [0], [1], [0, 0, 1, 1], [], []>} : vector<8x8xf32>, vector<8x32xf32>, vector<8x32xf32> -> vector<8x32xf32>
    %119 = arith.addf %95, %118 : vector<8x32xf32>
    %120 = vector.extract_strided_slice %41 {offsets = [0, 24], sizes = [8, 8], strides = [1, 1]} : vector<8x32xf32> to vector<8x8xf32>
    %121 = vector.extract_strided_slice %42 {offsets = [0, 24], sizes = [8, 8], strides = [1, 1]} : vector<8x32xf32> to vector<8x8xf32>
    %122 = vector.extract_strided_slice %43 {offsets = [0, 24], sizes = [8, 8], strides = [1, 1]} : vector<8x32xf32> to vector<8x8xf32>
    %cst_37 = arith.constant dense<0.000000e+00> : vector<8x8xf32>
    %123 = tpu.matmul %120, %121, %cst_37 {dimension_numbers = #tpu.dot_dimension_numbers<[1], [1], [0], [0], [0, 0, 1, 0], [], []>} : vector<8x8xf32>, vector<8x8xf32>, vector<8x8xf32> -> vector<8x8xf32>
    %cst_38 = arith.constant 0.353553385 : f32
    %124 = vector.broadcast %cst_38 : f32 to vector<8x8xf32>
    %125 = arith.mulf %123, %124 : vector<8x8xf32>
    %cst_39 = arith.constant -1.000000e+09 : f32
    %126 = vector.shape_cast %46 : vector<8x1xi1> to vector<8x1xi1>
    %127 = vector.broadcast %126 : vector<8x1xi1> to vector<8x8xi1>
    %128 = vector.broadcast %cst_39 : f32 to vector<8x8xf32>
    %129 = arith.select %127, %128, %125 : vector<8x8xi1>, vector<8x8xf32>
    %cst_40 = arith.constant dense<0xFF800000> : vector<8xf32>
    %130 = vector.multi_reduction <maximumf>, %129, %cst_40 [1] : vector<8x8xf32> to vector<8xf32>
    %131 = vector.shape_cast %130 : vector<8xf32> to vector<8x1xf32>
    %132 = vector.broadcast %131 : vector<8x1xf32> to vector<8x8xf32>
    %133 = arith.subf %129, %132 : vector<8x8xf32>
    %134 = math.exp %133 : vector<8x8xf32>
    %cst_41 = arith.constant dense<0.000000e+00> : vector<8xf32>
    %135 = vector.multi_reduction <add>, %134, %cst_41 [1] : vector<8x8xf32> to vector<8xf32>
    %136 = vector.shape_cast %135 : vector<8xf32> to vector<8x1xf32>
    %137 = tpu.reciprocal %136 {approx = true} : vector<8x1xf32> -> vector<8x1xf32>
    %138 = vector.broadcast %137 : vector<8x1xf32> to vector<8x8xf32>
    %139 = arith.mulf %134, %138 : vector<8x8xf32>
    %cst_42 = arith.constant dense<0.000000e+00> : vector<8x8xf32>
    %140 = tpu.matmul %139, %122, %cst_42 {dimension_numbers = #tpu.dot_dimension_numbers<[1], [0], [0], [1], [0, 0, 1, 1], [], []>} : vector<8x8xf32>, vector<8x8xf32>, vector<8x8xf32> -> vector<8x8xf32>
    %141 = vector.extract_strided_slice %40 {offsets = [24, 0], sizes = [8, 32], strides = [1, 1]} : vector<32x32xf32> to vector<8x32xf32>
    %cst_43 = arith.constant dense<0.000000e+00> : vector<8x32xf32>
    %142 = tpu.matmul %140, %141, %cst_43 {dimension_numbers = #tpu.dot_dimension_numbers<[1], [0], [0], [1], [0, 0, 1, 1], [], []>} : vector<8x8xf32>, vector<8x32xf32>, vector<8x32xf32> -> vector<8x32xf32>
    %143 = arith.addf %119, %142 : vector<8x32xf32>
    %144 = vector.extract_strided_slice %37 {offsets = [8, 0], sizes = [8, 32], strides = [1, 1]} : vector<16x32xf32> to vector<8x32xf32>
    %145 = vector.extract_strided_slice %38 {offsets = [8, 0], sizes = [8, 32], strides = [1, 1]} : vector<16x32xf32> to vector<8x32xf32>
    %146 = vector.extract_strided_slice %39 {offsets = [8, 0], sizes = [8, 32], strides = [1, 1]} : vector<16x32xf32> to vector<8x32xf32>
    %147 = vector.extract_strided_slice %1 {offsets = [8, 0], sizes = [8, 1], strides = [1, 1]} : vector<16x1xf32> to vector<8x1xf32>
    %cst_44 = arith.constant 5.000000e-01 : f32
    %148 = vector.broadcast %cst_44 : f32 to vector<8x1xf32>
    %149 = arith.cmpf ogt, %147, %148 : vector<8x1xf32>
    %cst_45 = arith.constant 0.000000e+00 : f32
    %150 = vector.broadcast %cst_45 : f32 to vector<8x32xf32>
    %151 = vector.extract_strided_slice %144 {offsets = [0, 0], sizes = [8, 8], strides = [1, 1]} : vector<8x32xf32> to vector<8x8xf32>
    %152 = vector.extract_strided_slice %145 {offsets = [0, 0], sizes = [8, 8], strides = [1, 1]} : vector<8x32xf32> to vector<8x8xf32>
    %153 = vector.extract_strided_slice %146 {offsets = [0, 0], sizes = [8, 8], strides = [1, 1]} : vector<8x32xf32> to vector<8x8xf32>
    %cst_46 = arith.constant dense<0.000000e+00> : vector<8x8xf32>
    %154 = tpu.matmul %151, %152, %cst_46 {dimension_numbers = #tpu.dot_dimension_numbers<[1], [1], [0], [0], [0, 0, 1, 0], [], []>} : vector<8x8xf32>, vector<8x8xf32>, vector<8x8xf32> -> vector<8x8xf32>
    %cst_47 = arith.constant 0.353553385 : f32
    %155 = vector.broadcast %cst_47 : f32 to vector<8x8xf32>
    %156 = arith.mulf %154, %155 : vector<8x8xf32>
    %cst_48 = arith.constant -1.000000e+09 : f32
    %157 = vector.shape_cast %149 : vector<8x1xi1> to vector<8x1xi1>
    %158 = vector.broadcast %157 : vector<8x1xi1> to vector<8x8xi1>
    %159 = vector.broadcast %cst_48 : f32 to vector<8x8xf32>
    %160 = arith.select %158, %159, %156 : vector<8x8xi1>, vector<8x8xf32>
    %cst_49 = arith.constant dense<0xFF800000> : vector<8xf32>
    %161 = vector.multi_reduction <maximumf>, %160, %cst_49 [1] : vector<8x8xf32> to vector<8xf32>
    %162 = vector.shape_cast %161 : vector<8xf32> to vector<8x1xf32>
    %163 = vector.broadcast %162 : vector<8x1xf32> to vector<8x8xf32>
    %164 = arith.subf %160, %163 : vector<8x8xf32>
    %165 = math.exp %164 : vector<8x8xf32>
    %cst_50 = arith.constant dense<0.000000e+00> : vector<8xf32>
    %166 = vector.multi_reduction <add>, %165, %cst_50 [1] : vector<8x8xf32> to vector<8xf32>
    %167 = vector.shape_cast %166 : vector<8xf32> to vector<8x1xf32>
    %168 = tpu.reciprocal %167 {approx = true} : vector<8x1xf32> -> vector<8x1xf32>
    %169 = vector.broadcast %168 : vector<8x1xf32> to vector<8x8xf32>
    %170 = arith.mulf %165, %169 : vector<8x8xf32>
    %cst_51 = arith.constant dense<0.000000e+00> : vector<8x8xf32>
    %171 = tpu.matmul %170, %153, %cst_51 {dimension_numbers = #tpu.dot_dimension_numbers<[1], [0], [0], [1], [0, 0, 1, 1], [], []>} : vector<8x8xf32>, vector<8x8xf32>, vector<8x8xf32> -> vector<8x8xf32>
    %172 = vector.extract_strided_slice %40 {offsets = [0, 0], sizes = [8, 32], strides = [1, 1]} : vector<32x32xf32> to vector<8x32xf32>
    %cst_52 = arith.constant dense<0.000000e+00> : vector<8x32xf32>
    %173 = tpu.matmul %171, %172, %cst_52 {dimension_numbers = #tpu.dot_dimension_numbers<[1], [0], [0], [1], [0, 0, 1, 1], [], []>} : vector<8x8xf32>, vector<8x32xf32>, vector<8x32xf32> -> vector<8x32xf32>
    %174 = arith.addf %150, %173 : vector<8x32xf32>
    %175 = vector.extract_strided_slice %144 {offsets = [0, 8], sizes = [8, 8], strides = [1, 1]} : vector<8x32xf32> to vector<8x8xf32>
    %176 = vector.extract_strided_slice %145 {offsets = [0, 8], sizes = [8, 8], strides = [1, 1]} : vector<8x32xf32> to vector<8x8xf32>
    %177 = vector.extract_strided_slice %146 {offsets = [0, 8], sizes = [8, 8], strides = [1, 1]} : vector<8x32xf32> to vector<8x8xf32>
    %cst_53 = arith.constant dense<0.000000e+00> : vector<8x8xf32>
    %178 = tpu.matmul %175, %176, %cst_53 {dimension_numbers = #tpu.dot_dimension_numbers<[1], [1], [0], [0], [0, 0, 1, 0], [], []>} : vector<8x8xf32>, vector<8x8xf32>, vector<8x8xf32> -> vector<8x8xf32>
    %cst_54 = arith.constant 0.353553385 : f32
    %179 = vector.broadcast %cst_54 : f32 to vector<8x8xf32>
    %180 = arith.mulf %178, %179 : vector<8x8xf32>
    %cst_55 = arith.constant -1.000000e+09 : f32
    %181 = vector.shape_cast %149 : vector<8x1xi1> to vector<8x1xi1>
    %182 = vector.broadcast %181 : vector<8x1xi1> to vector<8x8xi1>
    %183 = vector.broadcast %cst_55 : f32 to vector<8x8xf32>
    %184 = arith.select %182, %183, %180 : vector<8x8xi1>, vector<8x8xf32>
    %cst_56 = arith.constant dense<0xFF800000> : vector<8xf32>
    %185 = vector.multi_reduction <maximumf>, %184, %cst_56 [1] : vector<8x8xf32> to vector<8xf32>
    %186 = vector.shape_cast %185 : vector<8xf32> to vector<8x1xf32>
    %187 = vector.broadcast %186 : vector<8x1xf32> to vector<8x8xf32>
    %188 = arith.subf %184, %187 : vector<8x8xf32>
    %189 = math.exp %188 : vector<8x8xf32>
    %cst_57 = arith.constant dense<0.000000e+00> : vector<8xf32>
    %190 = vector.multi_reduction <add>, %189, %cst_57 [1] : vector<8x8xf32> to vector<8xf32>
    %191 = vector.shape_cast %190 : vector<8xf32> to vector<8x1xf32>
    %192 = tpu.reciprocal %191 {approx = true} : vector<8x1xf32> -> vector<8x1xf32>
    %193 = vector.broadcast %192 : vector<8x1xf32> to vector<8x8xf32>
    %194 = arith.mulf %189, %193 : vector<8x8xf32>
    %cst_58 = arith.constant dense<0.000000e+00> : vector<8x8xf32>
    %195 = tpu.matmul %194, %177, %cst_58 {dimension_numbers = #tpu.dot_dimension_numbers<[1], [0], [0], [1], [0, 0, 1, 1], [], []>} : vector<8x8xf32>, vector<8x8xf32>, vector<8x8xf32> -> vector<8x8xf32>
    %196 = vector.extract_strided_slice %40 {offsets = [8, 0], sizes = [8, 32], strides = [1, 1]} : vector<32x32xf32> to vector<8x32xf32>
    %cst_59 = arith.constant dense<0.000000e+00> : vector<8x32xf32>
    %197 = tpu.matmul %195, %196, %cst_59 {dimension_numbers = #tpu.dot_dimension_numbers<[1], [0], [0], [1], [0, 0, 1, 1], [], []>} : vector<8x8xf32>, vector<8x32xf32>, vector<8x32xf32> -> vector<8x32xf32>
    %198 = arith.addf %174, %197 : vector<8x32xf32>
    %199 = vector.extract_strided_slice %144 {offsets = [0, 16], sizes = [8, 8], strides = [1, 1]} : vector<8x32xf32> to vector<8x8xf32>
    %200 = vector.extract_strided_slice %145 {offsets = [0, 16], sizes = [8, 8], strides = [1, 1]} : vector<8x32xf32> to vector<8x8xf32>
    %201 = vector.extract_strided_slice %146 {offsets = [0, 16], sizes = [8, 8], strides = [1, 1]} : vector<8x32xf32> to vector<8x8xf32>
    %cst_60 = arith.constant dense<0.000000e+00> : vector<8x8xf32>
    %202 = tpu.matmul %199, %200, %cst_60 {dimension_numbers = #tpu.dot_dimension_numbers<[1], [1], [0], [0], [0, 0, 1, 0], [], []>} : vector<8x8xf32>, vector<8x8xf32>, vector<8x8xf32> -> vector<8x8xf32>
    %cst_61 = arith.constant 0.353553385 : f32
    %203 = vector.broadcast %cst_61 : f32 to vector<8x8xf32>
    %204 = arith.mulf %202, %203 : vector<8x8xf32>
    %cst_62 = arith.constant -1.000000e+09 : f32
    %205 = vector.shape_cast %149 : vector<8x1xi1> to vector<8x1xi1>
    %206 = vector.broadcast %205 : vector<8x1xi1> to vector<8x8xi1>
    %207 = vector.broadcast %cst_62 : f32 to vector<8x8xf32>
    %208 = arith.select %206, %207, %204 : vector<8x8xi1>, vector<8x8xf32>
    %cst_63 = arith.constant dense<0xFF800000> : vector<8xf32>
    %209 = vector.multi_reduction <maximumf>, %208, %cst_63 [1] : vector<8x8xf32> to vector<8xf32>
    %210 = vector.shape_cast %209 : vector<8xf32> to vector<8x1xf32>
    %211 = vector.broadcast %210 : vector<8x1xf32> to vector<8x8xf32>
    %212 = arith.subf %208, %211 : vector<8x8xf32>
    %213 = math.exp %212 : vector<8x8xf32>
    %cst_64 = arith.constant dense<0.000000e+00> : vector<8xf32>
    %214 = vector.multi_reduction <add>, %213, %cst_64 [1] : vector<8x8xf32> to vector<8xf32>
    %215 = vector.shape_cast %214 : vector<8xf32> to vector<8x1xf32>
    %216 = tpu.reciprocal %215 {approx = true} : vector<8x1xf32> -> vector<8x1xf32>
    %217 = vector.broadcast %216 : vector<8x1xf32> to vector<8x8xf32>
    %218 = arith.mulf %213, %217 : vector<8x8xf32>
    %cst_65 = arith.constant dense<0.000000e+00> : vector<8x8xf32>
    %219 = tpu.matmul %218, %201, %cst_65 {dimension_numbers = #tpu.dot_dimension_numbers<[1], [0], [0], [1], [0, 0, 1, 1], [], []>} : vector<8x8xf32>, vector<8x8xf32>, vector<8x8xf32> -> vector<8x8xf32>
    %220 = vector.extract_strided_slice %40 {offsets = [16, 0], sizes = [8, 32], strides = [1, 1]} : vector<32x32xf32> to vector<8x32xf32>
    %cst_66 = arith.constant dense<0.000000e+00> : vector<8x32xf32>
    %221 = tpu.matmul %219, %220, %cst_66 {dimension_numbers = #tpu.dot_dimension_numbers<[1], [0], [0], [1], [0, 0, 1, 1], [], []>} : vector<8x8xf32>, vector<8x32xf32>, vector<8x32xf32> -> vector<8x32xf32>
    %222 = arith.addf %198, %221 : vector<8x32xf32>
    %223 = vector.extract_strided_slice %144 {offsets = [0, 24], sizes = [8, 8], strides = [1, 1]} : vector<8x32xf32> to vector<8x8xf32>
    %224 = vector.extract_strided_slice %145 {offsets = [0, 24], sizes = [8, 8], strides = [1, 1]} : vector<8x32xf32> to vector<8x8xf32>
    %225 = vector.extract_strided_slice %146 {offsets = [0, 24], sizes = [8, 8], strides = [1, 1]} : vector<8x32xf32> to vector<8x8xf32>
    %cst_67 = arith.constant dense<0.000000e+00> : vector<8x8xf32>
    %226 = tpu.matmul %223, %224, %cst_67 {dimension_numbers = #tpu.dot_dimension_numbers<[1], [1], [0], [0], [0, 0, 1, 0], [], []>} : vector<8x8xf32>, vector<8x8xf32>, vector<8x8xf32> -> vector<8x8xf32>
    %cst_68 = arith.constant 0.353553385 : f32
    %227 = vector.broadcast %cst_68 : f32 to vector<8x8xf32>
    %228 = arith.mulf %226, %227 : vector<8x8xf32>
    %cst_69 = arith.constant -1.000000e+09 : f32
    %229 = vector.shape_cast %149 : vector<8x1xi1> to vector<8x1xi1>
    %230 = vector.broadcast %229 : vector<8x1xi1> to vector<8x8xi1>
    %231 = vector.broadcast %cst_69 : f32 to vector<8x8xf32>
    %232 = arith.select %230, %231, %228 : vector<8x8xi1>, vector<8x8xf32>
    %cst_70 = arith.constant dense<0xFF800000> : vector<8xf32>
    %233 = vector.multi_reduction <maximumf>, %232, %cst_70 [1] : vector<8x8xf32> to vector<8xf32>
    %234 = vector.shape_cast %233 : vector<8xf32> to vector<8x1xf32>
    %235 = vector.broadcast %234 : vector<8x1xf32> to vector<8x8xf32>
    %236 = arith.subf %232, %235 : vector<8x8xf32>
    %237 = math.exp %236 : vector<8x8xf32>
    %cst_71 = arith.constant dense<0.000000e+00> : vector<8xf32>
    %238 = vector.multi_reduction <add>, %237, %cst_71 [1] : vector<8x8xf32> to vector<8xf32>
    %239 = vector.shape_cast %238 : vector<8xf32> to vector<8x1xf32>
    %240 = tpu.reciprocal %239 {approx = true} : vector<8x1xf32> -> vector<8x1xf32>
    %241 = vector.broadcast %240 : vector<8x1xf32> to vector<8x8xf32>
    %242 = arith.mulf %237, %241 : vector<8x8xf32>
    %cst_72 = arith.constant dense<0.000000e+00> : vector<8x8xf32>
    %243 = tpu.matmul %242, %225, %cst_72 {dimension_numbers = #tpu.dot_dimension_numbers<[1], [0], [0], [1], [0, 0, 1, 1], [], []>} : vector<8x8xf32>, vector<8x8xf32>, vector<8x8xf32> -> vector<8x8xf32>
    %244 = vector.extract_strided_slice %40 {offsets = [24, 0], sizes = [8, 32], strides = [1, 1]} : vector<32x32xf32> to vector<8x32xf32>
    %cst_73 = arith.constant dense<0.000000e+00> : vector<8x32xf32>
    %245 = tpu.matmul %243, %244, %cst_73 {dimension_numbers = #tpu.dot_dimension_numbers<[1], [0], [0], [1], [0, 0, 1, 1], [], []>} : vector<8x8xf32>, vector<8x32xf32>, vector<8x32xf32> -> vector<8x32xf32>
    %246 = arith.addf %222, %245 : vector<8x32xf32>
    %247 = tpu.concatenate %143, %246 in 0 : vector<8x32xf32>, vector<8x32xf32> -> vector<16x32xf32>
    %248 = vector.broadcast %8 : vector<1x32xf32> to vector<16x32xf32>
    %249 = arith.addf %247, %248 : vector<16x32xf32>
    %250 = arith.addf %0, %249 : vector<16x32xf32>
    %cst_74 = arith.constant dense<0.000000e+00> : vector<16xf32>
    %251 = vector.multi_reduction <add>, %250, %cst_74 [1] : vector<16x32xf32> to vector<16xf32>
    %252 = vector.shape_cast %251 : vector<16xf32> to vector<16x1xf32>
    %cst_75 = arith.constant 3.200000e+01 : f32
    %253 = vector.broadcast %cst_75 : f32 to vector<16x1xf32>
    %254 = arith.divf %252, %253 : vector<16x1xf32>
    %255 = vector.broadcast %254 : vector<16x1xf32> to vector<16x32xf32>
    %256 = arith.subf %250, %255 : vector<16x32xf32>
    %257 = arith.mulf %256, %256 : vector<16x32xf32>
    %cst_76 = arith.constant dense<0.000000e+00> : vector<16xf32>
    %258 = vector.multi_reduction <add>, %257, %cst_76 [1] : vector<16x32xf32> to vector<16xf32>
    %259 = vector.shape_cast %258 : vector<16xf32> to vector<16x1xf32>
    %cst_77 = arith.constant 3.100000e+01 : f32
    %260 = vector.broadcast %cst_77 : f32 to vector<16x1xf32>
    %261 = arith.divf %259, %260 : vector<16x1xf32>
    %262 = math.sqrt %261 : vector<16x1xf32>
    %263 = vector.broadcast %254 : vector<16x1xf32> to vector<16x32xf32>
    %264 = arith.subf %250, %263 : vector<16x32xf32>
    %265 = vector.broadcast %5 : vector<1x32xf32> to vector<16x32xf32>
    %266 = arith.mulf %265, %264 : vector<16x32xf32>
    %cst_78 = arith.constant 9.99999997E-7 : f32
    %267 = vector.broadcast %cst_78 : f32 to vector<16x1xf32>
    %268 = arith.addf %262, %267 : vector<16x1xf32>
    %269 = vector.broadcast %268 : vector<16x1xf32> to vector<16x32xf32>
    %270 = arith.divf %266, %269 : vector<16x32xf32>
    %271 = vector.broadcast %6 : vector<1x32xf32> to vector<16x32xf32>
    %272 = arith.addf %270, %271 : vector<16x32xf32>
    %c0_79 = arith.constant 0 : index
    %c0_80 = arith.constant 0 : index
    %273 = vector.load %arg5[%c0_79, %c0_80] : memref<32x64xf32, #tpu.memory_space<vmem>>, vector<32x64xf32>
    %cst_81 = arith.constant dense<0.000000e+00> : vector<16x64xf32>
    %274 = tpu.matmul %272, %273, %cst_81 {dimension_numbers = #tpu.dot_dimension_numbers<[1], [0], [0], [1], [0, 0, 1, 1], [], []>} : vector<16x32xf32>, vector<32x64xf32>, vector<16x64xf32> -> vector<16x64xf32>
    %275 = vector.broadcast %9 : vector<1x64xf32> to vector<16x64xf32>
    %276 = arith.addf %274, %275 : vector<16x64xf32>
    %cst_82 = arith.constant 0.000000e+00 : f32
    %277 = vector.broadcast %cst_82 : f32 to vector<16x64xf32>
    %278 = arith.maximumf %276, %277 : vector<16x64xf32>
    %c0_83 = arith.constant 0 : index
    %c0_84 = arith.constant 0 : index
    %279 = vector.load %arg6[%c0_83, %c0_84] : memref<64x32xf32, #tpu.memory_space<vmem>>, vector<64x32xf32>
    %cst_85 = arith.constant dense<0.000000e+00> : vector<16x32xf32>
    %280 = tpu.matmul %278, %279, %cst_85 {dimension_numbers = #tpu.dot_dimension_numbers<[1], [0], [0], [1], [0, 0, 1, 1], [], []>} : vector<16x64xf32>, vector<64x32xf32>, vector<16x32xf32> -> vector<16x32xf32>
    %281 = vector.broadcast %10 : vector<1x32xf32> to vector<16x32xf32>
    %282 = arith.addf %280, %281 : vector<16x32xf32>
    %283 = arith.addf %250, %282 : vector<16x32xf32>
    %c0_86 = arith.constant 0 : index
    %c0_87 = arith.constant 0 : index
    %284 = vector.load %arg8[%c0_86, %c0_87] : memref<16x32xf32, #tpu.memory_space<vmem>>, vector<16x32xf32>
    tpu.vector_store %arg8[%c0_86, %c0_87], %283 {strides = array<i32>} : memref<16x32xf32, #tpu.memory_space<vmem>>, vector<16x32xf32>,
    return
  }
  func.func @transform_0(%arg0: i32) -> (i32, i32) {
    %c0_i32 = arith.constant 0 : i32
    %c0_i32_0 = arith.constant 0 : i32
    %c0_i32_1 = arith.constant 0 : i32
    return %c0_i32, %c0_i32_0 : i32, i32
  }
  func.func @transform_1(%arg0: i32) -> (i32, i32) {
    %c0_i32 = arith.constant 0 : i32
    %c0_i32_0 = arith.constant 0 : i32
    %c0_i32_1 = arith.constant 0 : i32
    return %c0_i32, %c0_i32_0 : i32, i32
  }
  func.func @transform_2(%arg0: i32) -> (i32, i32) {
    %c0_i32 = arith.constant 0 : i32
    %c0_i32_0 = arith.constant 0 : i32
    %c0_i32_1 = arith.constant 0 : i32
    return %c0_i32, %c0_i32_0 : i32, i32
  }
  func.func @transform_3(%arg0: i32) -> (i32, i32) {
    %c0_i32 = arith.constant 0 : i32
    %c0_i32_0 = arith.constant 0 : i32
    %c0_i32_1 = arith.constant 0 : i32
    return %c0_i32, %c0_i32_0 : i32, i32
  }
  func.func @transform_4(%arg0: i32) -> (i32, i32) {
    %c0_i32 = arith.constant 0 : i32
    %c0_i32_0 = arith.constant 0 : i32
    %c0_i32_1 = arith.constant 0 : i32
    return %c0_i32, %c0_i32_0 : i32, i32
  }
  func.func @transform_5(%arg0: i32) -> (i32, i32) {
    %c0_i32 = arith.constant 0 : i32
    %c0_i32_0 = arith.constant 0 : i32
    %c0_i32_1 = arith.constant 0 : i32
    return %c0_i32, %c0_i32_0 : i32, i32
  }
  func.func @transform_6(%arg0: i32) -> (i32, i32) {
    %c0_i32 = arith.constant 0 : i32
    %c0_i32_0 = arith.constant 0 : i32
    %c0_i32_1 = arith.constant 0 : i32
    return %c0_i32, %c0_i32_0 : i32, i32
  }
  func.func @transform_7(%arg0: i32) -> (i32, i32) {
    %c0_i32 = arith.constant 0 : i32
    %c0_i32_0 = arith.constant 0 : i32
    %c0_i32_1 = arith.constant 0 : i32
    return %c0_i32, %c0_i32_0 : i32, i32
  }
}

</mosaic_0001>

<llo_original>
// kernel: tpu_custom_call.1
$region0: #{tpu_custom_call.1}
  #allocation0 [shape = 'u32[]', space=smem, size = 0x4, offset = 0x4, fixed_abs, tag = 'smem constant byte address 0x4 - core index']
  #allocation1 [shape = 'u32[144,128]{1,0:T(1,128)}', space=vmem, size = 0x12000, scoped, tag = 'internal scratch']
  %s0 = inlined_call_operand.vmem [shape: f32[16,32], index: 0, kind: input, shape index: {}]
  %s1 = inlined_call_operand.vmem [shape: f32[16,1], index: 1, kind: input, shape index: {}]
  %s2 = inlined_call_operand.vmem [shape: f32[32,96], index: 2, kind: input, shape index: {}]
  %s3 = inlined_call_operand.vmem [shape: f32[32,32], index: 3, kind: input, shape index: {}]
  %s4 = inlined_call_operand.vmem [shape: f32[32,64], index: 4, kind: input, shape index: {}]
  %s5 = inlined_call_operand.vmem [shape: f32[64,32], index: 5, kind: input, shape index: {}]
  %s6 = inlined_call_operand.vmem [shape: f32[8,96], index: 6, kind: input, shape index: {}]
  %s7 = inlined_call_operand.hbm [shape: f32[16,32], index: 7, kind: output, shape index: {}]
  %s8 = sld [smem:[#allocation0]]
  $region38: #{tpu_custom_call.1} parent=0
    _
  %s10 = ssub.s32 1, %s8
  %s11 = scalar_select 0, %s10, %s8
  $region1: #{tpu_custom_call.1} parent=0
    #allocation2 [shape = 'u8[8192]{0}', space=vmem, size = 0x2000, scoped, tag = 'output window, operand 0, single buffered']
    #allocation3 [shape = 's32[1]{0}', space=sflag, size = 0x4, scoped, tag = 'scoped memory for tpu_custom_call.1']
    %12 = vsyncpa [#allocation3], 0
    // Predicated region
    $region2: #{tpu_custom_call.1} parent=1 // pred_check
      _
    $region3: #{tpu_custom_call.1} parent=1 // pred_check_branch
      %14 = sbr.rel (0) target = $region5
    $region4: #{tpu_custom_call.1} parent=1 // pred_region
      _
    $region5: #{tpu_custom_call.1} parent=1 // pred_fallthru
      _
    // Predicated region
    $region6: #{tpu_custom_call.1} parent=1 // pred_check
      _
    $region7: #{tpu_custom_call.1} parent=1 // pred_check_branch
      %16 = sbr.rel (0) target = $region9
    $region8: #{tpu_custom_call.1} parent=1 // pred_region
      _
    $region9: #{tpu_custom_call.1} parent=1 // pred_fallthru
      _
    // Predicated region
    $region10: #{tpu_custom_call.1} parent=1 // pred_check
      _
    $region11: #{tpu_custom_call.1} parent=1 // pred_check_branch
      %18 = sbr.rel (0) target = $region13
    $region12: #{tpu_custom_call.1} parent=1 // pred_region
      _
    $region13: #{tpu_custom_call.1} parent=1 // pred_fallthru
      _
    // Predicated region
    $region14: #{tpu_custom_call.1} parent=1 // pred_check
      _
    $region15: #{tpu_custom_call.1} parent=1 // pred_check_branch
      %20 = sbr.rel (0) target = $region17
    $region16: #{tpu_custom_call.1} parent=1 // pred_region
      _
    $region17: #{tpu_custom_call.1} parent=1 // pred_fallthru
      _
    // Predicated region
    $region18: #{tpu_custom_call.1} parent=1 // pred_check
      _
    $region19: #{tpu_custom_call.1} parent=1 // pred_check_branch
      %22 = sbr.rel (0) target = $region21
    $region20: #{tpu_custom_call.1} parent=1 // pred_region
      _
    $region21: #{tpu_custom_call.1} parent=1 // pred_fallthru
      _
    // Predicated region
    $region22: #{tpu_custom_call.1} parent=1 // pred_check
      _
    $region23: #{tpu_custom_call.1} parent=1 // pred_check_branch
      %24 = sbr.rel (0) target = $region25
    $region24: #{tpu_custom_call.1} parent=1 // pred_region
      _
    $region25: #{tpu_custom_call.1} parent=1 // pred_fallthru
      _
    // Predicated region
    $region26: #{tpu_custom_call.1} parent=1 // pred_check
      _
    $region27: #{tpu_custom_call.1} parent=1 // pred_check_branch
      %26 = sbr.rel (0) target = $region29
    $region28: #{tpu_custom_call.1} parent=1 // pred_region
      _
    $region29: #{tpu_custom_call.1} parent=1 // pred_fallthru
      _
    %v27 = vld [vmem:[%s0] sm:$0xff]
    %v28 = vld [vmem:[%s0 + $0x8] sm:$0xff]
    %v29 = vld [vmem:[%s1] sm:$0xff]
    %v30 = vld [vmem:[%s1 + $0x8] sm:$0xff]
    %v31 = vld [vmem:[%s6] sm:$0xff]
    %vm32 = vcmask 261120
    %v33 = vsel %vm32, %v27, 0.0
    %34 = vadd.xlane.f32.xlu0 %v33
    %v35 = vpop.xlane.xlu0 %34
    %v36 = vsel %vm32, %v28, 0.0
    %37 = vadd.xlane.f32.xlu0 %v36
    %v38 = vpop.xlane.xlu0 %37
    %v39 = vrcp.pop 32.0
    %v40 = vmul.f32 %v35, %v39
    %v41 = vmul.f32 %v38, %v39
    %v42 = vsub.f32 %v27, %v40
    %v43 = vsub.f32 %v28, %v41
    %v44 = vmul.f32 %v42, %v42
    %v45 = vmul.f32 %v43, %v43
    %v46 = vsel %vm32, %v44, 0.0
    %47 = vadd.xlane.f32.xlu0 %v46
    %v48 = vpop.xlane.xlu0 %47
    %v49 = vsel %vm32, %v45, 0.0
    %50 = vadd.xlane.f32.xlu0 %v49
    %v51 = vpop.xlane.xlu0 %50
    %v52 = vrcp.pop 31.0
    %v53 = vmul.f32 %v48, %v52
    %v54 = vmul.f32 %v51, %v52
    %v55 = vrsqrt.pop %v53
    %v56 = vmul.f32 %v53, %v55
    %vm57 = vcmp.eq.f32.partialorder %v53, inf
    %v58 = vsel %vm57, %v53, %v56
    %vm59 = vcmp.eq.f32.partialorder %v53, 0.0
    %v60 = vand.u32 %v53, 2147483648
    %v61 = vsel %vm59, %v60, %v58
    %v62 = vrsqrt.pop %v54
    %v63 = vmul.f32 %v54, %v62
    %vm64 = vcmp.eq.f32.partialorder %v54, inf
    %v65 = vsel %vm64, %v54, %v63
    %vm66 = vcmp.eq.f32.partialorder %v54, 0.0
    %v67 = vand.u32 %v54, 2147483648
    %v68 = vsel %vm66, %v67, %v65
    %v69 = vlaneseq
    %v70 = vshrl.u32 %v69, 7
    %v71 = vsub.s32 0, %v70
    %v72 = vrot.slane %v31, %v71
    %v73 = vmul.f32 %v72, %v42
    %v74 = vmul.f32 %v72, %v43
    %v75 = vadd.f32 %v61, 1e-06
    %v76 = vadd.f32 %v68, 1e-06
    %v77 = vrcp.pop %v75
    %v78 = vmul.f32 %v73, %v77
    %v79 = vrcp.pop %v76
    %v80 = vmul.f32 %v74, %v79
    %v81 = vlaneseq
    %v82 = vshrl.u32 %v81, 7
    %v83 = vsub.s32 1, %v82
    %v84 = vrot.slane %v31, %v83
    %v85 = vadd.f32 %v78, %v84
    %v86 = vadd.f32 %v80, %v84
    %v87 = vld [vmem:[%s2] sm:$0xff]
    %v88 = vld [vmem:[%s2 + $0x8] sm:$0xff]
    %v89 = vld [vmem:[%s2 + $0x10] sm:$0xff]
    %v90 = vld [vmem:[%s2 + $0x18] sm:$0xff]
    %v91 = vlaneseq
    %v92 = vshrl.u32 %v91, 7
    %v93 = vsub.s32 4, %v92
    %v94 = vrot.slane %v31, %v93
    %v96 = vsel %vm32, %v85, 0
    %v99 = vsel %vm32, %v86, 0
    %101 = vmatprep.subr.mxu0 0.0
    %102 = vmatpush1.msra.mxu0 0.0
    %103 = vmatprep.subr.mxu0 0.0
    %104 = vmatpush1.msra.mxu0 0.0
    %105 = vmatprep.subr.mxu0 0.0
    %106 = vmatpush1.msra.mxu0 0.0
    %107 = vmatprep.subr.mxu0 0.0
    %108 = vmatpush1.msra.mxu0 0.0
    %109 = vmatprep.subr.mxu0 0.0
    %110 = vmatpush1.msra.mxu0 0.0
    %111 = vmatprep.subr.mxu0 0.0
    %112 = vmatpush1.msra.mxu0 0.0
    %113 = vmatprep.subr.mxu0 0.0
    %114 = vmatpush1.msra.mxu0 0.0
    %115 = vmatprep.subr.mxu0 0.0
    %116 = vmatpush1.msra.mxu0 0.0
    %117 = vmatprep.subr.mxu0 0.0
    %118 = vmatpush1.msra.mxu0 0.0
    %119 = vmatprep.subr.mxu0 0.0
    %120 = vmatpush1.msra.mxu0 0.0
    %121 = vmatprep.subr.mxu0 0.0
    %122 = vmatpush1.msra.mxu0 0.0
    %123 = vmatprep.subr.mxu0 0.0
    %124 = vmatpush1.msra.mxu0 0.0
    %125 = vmatprep.subr.mxu0 0.0
    %126 = vmatpush1.msra.mxu0 %v90
    %127 = vmatprep.subr.mxu0 0.0
    %128 = vmatpush1.msra.mxu0 %v89
    %129 = vmatprep.subr.mxu0 0.0
    %130 = vmatpush1.msra.mxu0 %v88
    %131 = vmatprep.subr.mxu0 0.0
    %132 = vmatpush1.msra.mxu0 %v87
    %133 = vmatprep.subr.mxu0 0.0
    %134 = vmatpush2.msra.mxu0 0.0
    %135 = vmatprep.subr.mxu0 0.0
    %136 = vmatpush2.msra.mxu0 0.0
    %137 = vmatprep.subr.mxu0 0.0
    %138 = vmatpush2.msra.mxu0 0.0
    %139 = vmatprep.subr.mxu0 0.0
    %140 = vmatpush2.msra.mxu0 0.0
    %141 = vmatprep.subr.mxu0 0.0
    %142 = vmatpush2.msra.mxu0 0.0
    %143 = vmatprep.subr.mxu0 0.0
    %144 = vmatpush2.msra.mxu0 0.0
    %145 = vmatprep.subr.mxu0 0.0
    %146 = vmatpush2.msra.mxu0 0.0
    %147 = vmatprep.subr.mxu0 0.0
    %148 = vmatpush2.msra.mxu0 0.0
    %149 = vmatprep.subr.mxu0 0.0
    %150 = vmatpush2.msra.mxu0 0.0
    %151 = vmatprep.subr.mxu0 0.0
    %152 = vmatpush2.msra.mxu0 0.0
    %153 = vmatprep.subr.mxu0 0.0
    %154 = vmatpush2.msra.mxu0 0.0
    %155 = vmatprep.subr.mxu0 0.0
    %156 = vmatpush2.msra.mxu0 0.0
    %157 = vmatprep.subr.mxu0 0.0
    %158 = vmatpush2.msra.mxu0 0.0
    %159 = vmatprep.subr.mxu0 0.0
    %160 = vmatpush2.msra.mxu0 0.0
    %161 = vmatprep.subr.mxu0 0.0
    %162 = vmatpush2.msra.mxu0 0.0
    %163 = vmatprep.subr.mxu0 0.0
    %164 = vmatpush2.msra.mxu0 0.0
    %165 = vmatprep.mubr.f32.mxu0 0.0
    %166 = vmatmul.mubr.f32.gmra.mxu0 %v96
    %v167 = vpop.f32.mrf.mxu0
    %v168 = vadd.f32 %v94, %v167
    %v169 = vpop.f32.mrf.mxu0
    %170 = vmatprep.mubr.f32.mxu0 0.0
    %171 = vmatmul.mubr.f32.gmra.mxu0 %v99
    %v172 = vpop.f32.mrf.mxu0
    %v173 = vadd.f32 %v94, %v172
    %v174 = vpop.f32.mrf.mxu0
    %175 = vdwg.mxu0
    %v176 = vld [vmem:[%s3] sm:$0xff]
    %v177 = vld [vmem:[%s3 + $0x8] sm:$0xff]
    %v178 = vld [vmem:[%s3 + $0x10] sm:$0xff]
    %v179 = vld [vmem:[%s3 + $0x18] sm:$0xff]
    %vm180 = vcmp.gt.f32.partialorder %v29, 0.5
    %182 = vrot.lane.b32.xlu0 %v168, 96
    %v183 = vpop.permute.xlu0 %182
    %vm184 = vcmask 64512
    %v185 = vsel %vm184, %v168, 0
    %v187 = vsel %vm184, %v183, 0
    %189 = vmatprep.subr.mxu0 0.0
    %190 = vmatpush1.xpose.msra.mxu0 0.0
    %191 = vmatprep.subr.mxu0 0.0
    %192 = vmatpush1.xpose.msra.mxu0 0.0
    %193 = vmatprep.subr.mxu0 0.0
    %194 = vmatpush1.xpose.msra.mxu0 0.0
    %195 = vmatprep.subr.mxu0 0.0
    %196 = vmatpush1.xpose.msra.mxu0 0.0
    %197 = vmatprep.subr.mxu0 0.0
    %198 = vmatpush1.xpose.msra.mxu0 0.0
    %199 = vmatprep.subr.mxu0 0.0
    %200 = vmatpush1.xpose.msra.mxu0 0.0
    %201 = vmatprep.subr.mxu0 0.0
    %202 = vmatpush1.xpose.msra.mxu0 0.0
    %203 = vmatprep.subr.mxu0 0.0
    %204 = vmatpush1.xpose.msra.mxu0 0.0
    %205 = vmatprep.subr.mxu0 0.0
    %206 = vmatpush1.xpose.msra.mxu0 0.0
    %207 = vmatprep.subr.mxu0 0.0
    %208 = vmatpush1.xpose.msra.mxu0 0.0
    %209 = vmatprep.subr.mxu0 0.0
    %210 = vmatpush1.xpose.msra.mxu0 0.0
    %211 = vmatprep.subr.mxu0 0.0
    %212 = vmatpush1.xpose.msra.mxu0 0.0
    %213 = vmatprep.subr.mxu0 0.0
    %214 = vmatpush1.xpose.msra.mxu0 0.0
    %215 = vmatprep.subr.mxu0 0.0
    %216 = vmatpush1.xpose.msra.mxu0 0.0
    %217 = vmatprep.subr.mxu0 0.0
    %218 = vmatpush1.xpose.msra.mxu0 0.0
    %219 = vmatprep.subr.mxu0 0.0
    %220 = vmatpush1.xpose.msra.mxu0 %v187
    %221 = vmatprep.subr.mxu0 0.0
    %222 = vmatpush2.xpose.msra.mxu0 0.0
    %223 = vmatprep.subr.mxu0 0.0
    %224 = vmatpush2.xpose.msra.mxu0 0.0
    %225 = vmatprep.subr.mxu0 0.0
    %226 = vmatpush2.xpose.msra.mxu0 0.0
    %227 = vmatprep.subr.mxu0 0.0
    %228 = vmatpush2.xpose.msra.mxu0 0.0
    %229 = vmatprep.subr.mxu0 0.0
    %230 = vmatpush2.xpose.msra.mxu0 0.0
    %231 = vmatprep.subr.mxu0 0.0
    %232 = vmatpush2.xpose.msra.mxu0 0.0
    %233 = vmatprep.subr.mxu0 0.0
    %234 = vmatpush2.xpose.msra.mxu0 0.0
    %235 = vmatprep.subr.mxu0 0.0
    %236 = vmatpush2.xpose.msra.mxu0 0.0
    %237 = vmatprep.subr.mxu0 0.0
    %238 = vmatpush2.xpose.msra.mxu0 0.0
    %239 = vmatprep.subr.mxu0 0.0
    %240 = vmatpush2.xpose.msra.mxu0 0.0
    %241 = vmatprep.subr.mxu0 0.0
    %242 = vmatpush2.xpose.msra.mxu0 0.0
    %243 = vmatprep.subr.mxu0 0.0
    %244 = vmatpush2.xpose.msra.mxu0 0.0
    %245 = vmatprep.subr.mxu0 0.0
    %246 = vmatpush2.xpose.msra.mxu0 0.0
    %247 = vmatprep.subr.mxu0 0.0
    %248 = vmatpush2.xpose.msra.mxu0 0.0
    %249 = vmatprep.subr.mxu0 0.0
    %250 = vmatpush2.xpose.msra.mxu0 0.0
    %251 = vmatprep.subr.mxu0 0.0
    %252 = vmatpush2.xpose.msra.mxu0 0.0
    %253 = vmatprep.mubr.f32.mxu0 0.0
    %254 = vmatmul.mubr.f32.gmra.mxu0 %v185
    %v255 = vpop.f32.mrf.mxu0
    %v256 = vadd.f32 0.0, %v255
    %v257 = vpop.f32.mrf.mxu0
    %258 = vdwg.mxu0
    %v259 = vmul.f32 %v256, 0.35355338
    %v260 = vsel %vm180, 1, 0
    %261 = vset.pattern.permute.xlu0 0
    %262 = vperm.xlu0 %261, %v260
    %v263 = vpop.permute.xlu0 %262
    %vm264 = vcmp.eq.s32.totalorder %v263, 1
    %v265 = vsel %vm264, -1e+09, %v259
    %v266 = vsel %vm184, %v265, -inf
    %267 = vmax.xlane.f32.xlu0 %v266
    %v268 = vpop.xlane.xlu0 %267
    %v269 = vsub.f32 %v265, %v268
    %v270 = vmul.f32 %v269, 1.442695
    %v271 = vpow.pop %v270
    %v272 = vsel %vm184, %v271, 0.0
    %273 = vadd.xlane.f32.xlu0 %v272
    %v274 = vpop.xlane.xlu0 %273
    %v275 = vrcp.pop %v274
    %v276 = vmul.f32 %v271, %v275
    %277 = vrot.lane.b32.xlu0 %v168, 64
    %v278 = vpop.permute.xlu0 %277
    %v281 = vsel %vm184, %v276, 0
    %283 = vmatprep.subr.mxu0 0.0
    %284 = vmatpush1.msra.mxu0 0.0
    %285 = vmatprep.subr.mxu0 0.0
    %286 = vmatpush1.msra.mxu0 0.0
    %287 = vmatprep.subr.mxu0 0.0
    %288 = vmatpush1.msra.mxu0 0.0
    %289 = vmatprep.subr.mxu0 0.0
    %290 = vmatpush1.msra.mxu0 0.0
    %291 = vmatprep.subr.mxu0 0.0
    %292 = vmatpush1.msra.mxu0 0.0
    %293 = vmatprep.subr.mxu0 0.0
    %294 = vmatpush1.msra.mxu0 0.0
    %295 = vmatprep.subr.mxu0 0.0
    %296 = vmatpush1.msra.mxu0 0.0
    %297 = vmatprep.subr.mxu0 0.0
    %298 = vmatpush1.msra.mxu0 0.0
    %299 = vmatprep.subr.mxu0 0.0
    %300 = vmatpush1.msra.mxu0 0.0
    %301 = vmatprep.subr.mxu0 0.0
    %302 = vmatpush1.msra.mxu0 0.0
    %303 = vmatprep.subr.mxu0 0.0
    %304 = vmatpush1.msra.mxu0 0.0
    %305 = vmatprep.subr.mxu0 0.0
    %306 = vmatpush1.msra.mxu0 0.0
    %307 = vmatprep.subr.mxu0 0.0
    %308 = vmatpush1.msra.mxu0 0.0
    %309 = vmatprep.subr.mxu0 0.0
    %310 = vmatpush1.msra.mxu0 0.0
    %311 = vmatprep.subr.mxu0 0.0
    %312 = vmatpush1.msra.mxu0 0.0
    %313 = vmatprep.subr.mxu0 0.0
    %314 = vmatpush1.msra.mxu0 %v278
    %315 = vmatprep.subr.mxu0 0.0
    %316 = vmatpush2.msra.mxu0 0.0
    %317 = vmatprep.subr.mxu0 0.0
    %318 = vmatpush2.msra.mxu0 0.0
    %319 = vmatprep.subr.mxu0 0.0
    %320 = vmatpush2.msra.mxu0 0.0
    %321 = vmatprep.subr.mxu0 0.0
    %322 = vmatpush2.msra.mxu0 0.0
    %323 = vmatprep.subr.mxu0 0.0
    %324 = vmatpush2.msra.mxu0 0.0
    %325 = vmatprep.subr.mxu0 0.0
    %326 = vmatpush2.msra.mxu0 0.0
    %327 = vmatprep.subr.mxu0 0.0
    %328 = vmatpush2.msra.mxu0 0.0
    %329 = vmatprep.subr.mxu0 0.0
    %330 = vmatpush2.msra.mxu0 0.0
    %331 = vmatprep.subr.mxu0 0.0
    %332 = vmatpush2.msra.mxu0 0.0
    %333 = vmatprep.subr.mxu0 0.0
    %334 = vmatpush2.msra.mxu0 0.0
    %335 = vmatprep.subr.mxu0 0.0
    %336 = vmatpush2.msra.mxu0 0.0
    %337 = vmatprep.subr.mxu0 0.0
    %338 = vmatpush2.msra.mxu0 0.0
    %339 = vmatprep.subr.mxu0 0.0
    %340 = vmatpush2.msra.mxu0 0.0
    %341 = vmatprep.subr.mxu0 0.0
    %342 = vmatpush2.msra.mxu0 0.0
    %343 = vmatprep.subr.mxu0 0.0
    %344 = vmatpush2.msra.mxu0 0.0
    %345 = vmatprep.subr.mxu0 0.0
    %346 = vmatpush2.msra.mxu0 0.0
    %347 = vmatprep.mubr.f32.mxu0 0.0
    %348 = vmatmul.mubr.f32.gmra.mxu0 %v281
    %v349 = vpop.f32.mrf.mxu0
    %v350 = vadd.f32 0.0, %v349
    %v351 = vpop.f32.mrf.mxu0
    %352 = vdwg.mxu0
    %353 = vrot.lane.b32.xlu0 %v168, 120
    %v354 = vpop.permute.xlu0 %353
    %355 = vrot.lane.b32.xlu0 %v168, 88
    %v356 = vpop.permute.xlu0 %355
    %v357 = vsel %vm184, %v354, 0
    %v359 = vsel %vm184, %v356, 0
    %361 = vmatprep.subr.mxu0 0.0
    %362 = vmatpush1.xpose.msra.mxu0 0.0
    %363 = vmatprep.subr.mxu0 0.0
    %364 = vmatpush1.xpose.msra.mxu0 0.0
    %365 = vmatprep.subr.mxu0 0.0
    %366 = vmatpush1.xpose.msra.mxu0 0.0
    %367 = vmatprep.subr.mxu0 0.0
    %368 = vmatpush1.xpose.msra.mxu0 0.0
    %369 = vmatprep.subr.mxu0 0.0
    %370 = vmatpush1.xpose.msra.mxu0 0.0
    %371 = vmatprep.subr.mxu0 0.0
    %372 = vmatpush1.xpose.msra.mxu0 0.0
    %373 = vmatprep.subr.mxu0 0.0
    %374 = vmatpush1.xpose.msra.mxu0 0.0
    %375 = vmatprep.subr.mxu0 0.0
    %376 = vmatpush1.xpose.msra.mxu0 0.0
    %377 = vmatprep.subr.mxu0 0.0
    %378 = vmatpush1.xpose.msra.mxu0 0.0
    %379 = vmatprep.subr.mxu0 0.0
    %380 = vmatpush1.xpose.msra.mxu0 0.0
    %381 = vmatprep.subr.mxu0 0.0
    %382 = vmatpush1.xpose.msra.mxu0 0.0
    %383 = vmatprep.subr.mxu0 0.0
    %384 = vmatpush1.xpose.msra.mxu0 0.0
    %385 = vmatprep.subr.mxu0 0.0
    %386 = vmatpush1.xpose.msra.mxu0 0.0
    %387 = vmatprep.subr.mxu0 0.0
    %388 = vmatpush1.xpose.msra.mxu0 0.0
    %389 = vmatprep.subr.mxu0 0.0
    %390 = vmatpush1.xpose.msra.mxu0 0.0
    %391 = vmatprep.subr.mxu0 0.0
    %392 = vmatpush1.xpose.msra.mxu0 %v359
    %393 = vmatprep.subr.mxu0 0.0
    %394 = vmatpush2.xpose.msra.mxu0 0.0
    %395 = vmatprep.subr.mxu0 0.0
    %396 = vmatpush2.xpose.msra.mxu0 0.0
    %397 = vmatprep.subr.mxu0 0.0
    %398 = vmatpush2.xpose.msra.mxu0 0.0
    %399 = vmatprep.subr.mxu0 0.0
    %400 = vmatpush2.xpose.msra.mxu0 0.0
    %401 = vmatprep.subr.mxu0 0.0
    %402 = vmatpush2.xpose.msra.mxu0 0.0
    %403 = vmatprep.subr.mxu0 0.0
    %404 = vmatpush2.xpose.msra.mxu0 0.0
    %405 = vmatprep.subr.mxu0 0.0
    %406 = vmatpush2.xpose.msra.mxu0 0.0
    %407 = vmatprep.subr.mxu0 0.0
    %408 = vmatpush2.xpose.msra.mxu0 0.0
    %409 = vmatprep.subr.mxu0 0.0
    %410 = vmatpush2.xpose.msra.mxu0 0.0
    %411 = vmatprep.subr.mxu0 0.0
    %412 = vmatpush2.xpose.msra.mxu0 0.0
    %413 = vmatprep.subr.mxu0 0.0
    %414 = vmatpush2.xpose.msra.mxu0 0.0
    %415 = vmatprep.subr.mxu0 0.0
    %416 = vmatpush2.xpose.msra.mxu0 0.0
    %417 = vmatprep.subr.mxu0 0.0
    %418 = vmatpush2.xpose.msra.mxu0 0.0
    %419 = vmatprep.subr.mxu0 0.0
    %420 = vmatpush2.xpose.msra.mxu0 0.0
    %421 = vmatprep.subr.mxu0 0.0
    %422 = vmatpush2.xpose.msra.mxu0 0.0
    %423 = vmatprep.subr.mxu0 0.0
    %424 = vmatpush2.xpose.msra.mxu0 0.0
    %425 = vmatprep.mubr.f32.mxu0 0.0
    %426 = vmatmul.mubr.f32.gmra.mxu0 %v357
    %v427 = vpop.f32.mrf.mxu0
    %v428 = vadd.f32 0.0, %v427
    %v429 = vpop.f32.mrf.mxu0
    %430 = vdwg.mxu0
    %v431 = vmul.f32 %v428, 0.35355338
    %v432 = vsel %vm264, -1e+09, %v431
    %v433 = vsel %vm184, %v432, -inf
    %434 = vmax.xlane.f32.xlu0 %v433
    %v435 = vpop.xlane.xlu0 %434
    %v436 = vsub.f32 %v432, %v435
    %v437 = vmul.f32 %v436, 1.442695
    %v438 = vpow.pop %v437
    %v439 = vsel %vm184, %v438, 0.0
    %440 = vadd.xlane.f32.xlu0 %v439
    %v441 = vpop.xlane.xlu0 %440
    %v442 = vrcp.pop %v441
    %v443 = vmul.f32 %v438, %v442
    %444 = vrot.lane.b32.xlu0 %v168, 56
    %v445 = vpop.permute.xlu0 %444
    %v448 = vsel %vm184, %v443, 0
    %450 = vmatprep.subr.mxu0 0.0
    %451 = vmatpush1.msra.mxu0 0.0
    %452 = vmatprep.subr.mxu0 0.0
    %453 = vmatpush1.msra.mxu0 0.0
    %454 = vmatprep.subr.mxu0 0.0
    %455 = vmatpush1.msra.mxu0 0.0
    %456 = vmatprep.subr.mxu0 0.0
    %457 = vmatpush1.msra.mxu0 0.0
    %458 = vmatprep.subr.mxu0 0.0
    %459 = vmatpush1.msra.mxu0 0.0
    %460 = vmatprep.subr.mxu0 0.0
    %461 = vmatpush1.msra.mxu0 0.0
    %462 = vmatprep.subr.mxu0 0.0
    %463 = vmatpush1.msra.mxu0 0.0
    %464 = vmatprep.subr.mxu0 0.0
    %465 = vmatpush1.msra.mxu0 0.0
    %466 = vmatprep.subr.mxu0 0.0
    %467 = vmatpush1.msra.mxu0 0.0
    %468 = vmatprep.subr.mxu0 0.0
    %469 = vmatpush1.msra.mxu0 0.0
    %470 = vmatprep.subr.mxu0 0.0
    %471 = vmatpush1.msra.mxu0 0.0
    %472 = vmatprep.subr.mxu0 0.0
    %473 = vmatpush1.msra.mxu0 0.0
    %474 = vmatprep.subr.mxu0 0.0
    %475 = vmatpush1.msra.mxu0 0.0
    %476 = vmatprep.subr.mxu0 0.0
    %477 = vmatpush1.msra.mxu0 0.0
    %478 = vmatprep.subr.mxu0 0.0
    %479 = vmatpush1.msra.mxu0 0.0
    %480 = vmatprep.subr.mxu0 0.0
    %481 = vmatpush1.msra.mxu0 %v445
    %482 = vmatprep.subr.mxu0 0.0
    %483 = vmatpush2.msra.mxu0 0.0
    %484 = vmatprep.subr.mxu0 0.0
    %485 = vmatpush2.msra.mxu0 0.0
    %486 = vmatprep.subr.mxu0 0.0
    %487 = vmatpush2.msra.mxu0 0.0
    %488 = vmatprep.subr.mxu0 0.0
    %489 = vmatpush2.msra.mxu0 0.0
    %490 = vmatprep.subr.mxu0 0.0
    %491 = vmatpush2.msra.mxu0 0.0
    %492 = vmatprep.subr.mxu0 0.0
    %493 = vmatpush2.msra.mxu0 0.0
    %494 = vmatprep.subr.mxu0 0.0
    %495 = vmatpush2.msra.mxu0 0.0
    %496 = vmatprep.subr.mxu0 0.0
    %497 = vmatpush2.msra.mxu0 0.0
    %498 = vmatprep.subr.mxu0 0.0
    %499 = vmatpush2.msra.mxu0 0.0
    %500 = vmatprep.subr.mxu0 0.0
    %501 = vmatpush2.msra.mxu0 0.0
    %502 = vmatprep.subr.mxu0 0.0
    %503 = vmatpush2.msra.mxu0 0.0
    %504 = vmatprep.subr.mxu0 0.0
    %505 = vmatpush2.msra.mxu0 0.0
    %506 = vmatprep.subr.mxu0 0.0
    %507 = vmatpush2.msra.mxu0 0.0
    %508 = vmatprep.subr.mxu0 0.0
    %509 = vmatpush2.msra.mxu0 0.0
    %510 = vmatprep.subr.mxu0 0.0
    %511 = vmatpush2.msra.mxu0 0.0
    %512 = vmatprep.subr.mxu0 0.0
    %513 = vmatpush2.msra.mxu0 0.0
    %514 = vmatprep.mubr.f32.mxu0 0.0
    %515 = vmatmul.mubr.f32.gmra.mxu0 %v448
    %v516 = vpop.f32.mrf.mxu0
    %v517 = vadd.f32 0.0, %v516
    %v518 = vpop.f32.mrf.mxu0
    %519 = vdwg.mxu0
    %v521 = vsel %vm184, %v517, 0
    %523 = vmatprep.subr.mxu0 0.0
    %524 = vmatpush1.msra.mxu0 0.0
    %525 = vmatprep.subr.mxu0 0.0
    %526 = vmatpush1.msra.mxu0 0.0
    %527 = vmatprep.subr.mxu0 0.0
    %528 = vmatpush1.msra.mxu0 0.0
    %529 = vmatprep.subr.mxu0 0.0
    %530 = vmatpush1.msra.mxu0 0.0
    %531 = vmatprep.subr.mxu0 0.0
    %532 = vmatpush1.msra.mxu0 0.0
    %533 = vmatprep.subr.mxu0 0.0
    %534 = vmatpush1.msra.mxu0 0.0
    %535 = vmatprep.subr.mxu0 0.0
    %536 = vmatpush1.msra.mxu0 0.0
    %537 = vmatprep.subr.mxu0 0.0
    %538 = vmatpush1.msra.mxu0 0.0
    %539 = vmatprep.subr.mxu0 0.0
    %540 = vmatpush1.msra.mxu0 0.0
    %541 = vmatprep.subr.mxu0 0.0
    %542 = vmatpush1.msra.mxu0 0.0
    %543 = vmatprep.subr.mxu0 0.0
    %544 = vmatpush1.msra.mxu0 0.0
    %545 = vmatprep.subr.mxu0 0.0
    %546 = vmatpush1.msra.mxu0 0.0
    %547 = vmatprep.subr.mxu0 0.0
    %548 = vmatpush1.msra.mxu0 0.0
    %549 = vmatprep.subr.mxu0 0.0
    %550 = vmatpush1.msra.mxu0 0.0
    %551 = vmatprep.subr.mxu0 0.0
    %552 = vmatpush1.msra.mxu0 0.0
    %553 = vmatprep.subr.mxu0 0.0
    %554 = vmatpush1.msra.mxu0 %v177
    %555 = vmatprep.subr.mxu0 0.0
    %556 = vmatpush2.msra.mxu0 0.0
    %557 = vmatprep.subr.mxu0 0.0
    %558 = vmatpush2.msra.mxu0 0.0
    %559 = vmatprep.subr.mxu0 0.0
    %560 = vmatpush2.msra.mxu0 0.0
    %561 = vmatprep.subr.mxu0 0.0
    %562 = vmatpush2.msra.mxu0 0.0
    %563 = vmatprep.subr.mxu0 0.0
    %564 = vmatpush2.msra.mxu0 0.0
    %565 = vmatprep.subr.mxu0 0.0
    %566 = vmatpush2.msra.mxu0 0.0
    %567 = vmatprep.subr.mxu0 0.0
    %568 = vmatpush2.msra.mxu0 0.0
    %569 = vmatprep.subr.mxu0 0.0
    %570 = vmatpush2.msra.mxu0 0.0
    %571 = vmatprep.subr.mxu0 0.0
    %572 = vmatpush2.msra.mxu0 0.0
    %573 = vmatprep.subr.mxu0 0.0
    %574 = vmatpush2.msra.mxu0 0.0
    %575 = vmatprep.subr.mxu0 0.0
    %576 = vmatpush2.msra.mxu0 0.0
    %577 = vmatprep.subr.mxu0 0.0
    %578 = vmatpush2.msra.mxu0 0.0
    %579 = vmatprep.subr.mxu0 0.0
    %580 = vmatpush2.msra.mxu0 0.0
    %581 = vmatprep.subr.mxu0 0.0
    %582 = vmatpush2.msra.mxu0 0.0
    %583 = vmatprep.subr.mxu0 0.0
    %584 = vmatpush2.msra.mxu0 0.0
    %585 = vmatprep.subr.mxu0 0.0
    %586 = vmatpush2.msra.mxu0 0.0
    %587 = vmatprep.mubr.f32.mxu0 0.0
    %588 = vmatmul.mubr.f32.gmra.mxu0 %v521
    %v589 = vpop.f32.mrf.mxu0
    %v590 = vadd.f32 0.0, %v589
    %v591 = vpop.f32.mrf.mxu0
    %592 = vdwg.mxu0
    %v594 = vsel %vm184, %v350, 0
    %596 = vmatprep.subr.mxu0 0.0
    %597 = vmatpush1.msra.mxu0 0.0
    %598 = vmatprep.subr.mxu0 0.0
    %599 = vmatpush1.msra.mxu0 0.0
    %600 = vmatprep.subr.mxu0 0.0
    %601 = vmatpush1.msra.mxu0 0.0
    %602 = vmatprep.subr.mxu0 0.0
    %603 = vmatpush1.msra.mxu0 0.0
    %604 = vmatprep.subr.mxu0 0.0
    %605 = vmatpush1.msra.mxu0 0.0
    %606 = vmatprep.subr.mxu0 0.0
    %607 = vmatpush1.msra.mxu0 0.0
    %608 = vmatprep.subr.mxu0 0.0
    %609 = vmatpush1.msra.mxu0 0.0
    %610 = vmatprep.subr.mxu0 0.0
    %611 = vmatpush1.msra.mxu0 0.0
    %612 = vmatprep.subr.mxu0 0.0
    %613 = vmatpush1.msra.mxu0 0.0
    %614 = vmatprep.subr.mxu0 0.0
    %615 = vmatpush1.msra.mxu0 0.0
    %616 = vmatprep.subr.mxu0 0.0
    %617 = vmatpush1.msra.mxu0 0.0
    %618 = vmatprep.subr.mxu0 0.0
    %619 = vmatpush1.msra.mxu0 0.0
    %620 = vmatprep.subr.mxu0 0.0
    %621 = vmatpush1.msra.mxu0 0.0
    %622 = vmatprep.subr.mxu0 0.0
    %623 = vmatpush1.msra.mxu0 0.0
    %624 = vmatprep.subr.mxu0 0.0
    %625 = vmatpush1.msra.mxu0 0.0
    %626 = vmatprep.subr.mxu0 0.0
    %627 = vmatpush1.msra.mxu0 %v176
    %628 = vmatprep.subr.mxu0 0.0
    %629 = vmatpush2.msra.mxu0 0.0
    %630 = vmatprep.subr.mxu0 0.0
    %631 = vmatpush2.msra.mxu0 0.0
    %632 = vmatprep.subr.mxu0 0.0
    %633 = vmatpush2.msra.mxu0 0.0
    %634 = vmatprep.subr.mxu0 0.0
    %635 = vmatpush2.msra.mxu0 0.0
    %636 = vmatprep.subr.mxu0 0.0
    %637 = vmatpush2.msra.mxu0 0.0
    %638 = vmatprep.subr.mxu0 0.0
    %639 = vmatpush2.msra.mxu0 0.0
    %640 = vmatprep.subr.mxu0 0.0
    %641 = vmatpush2.msra.mxu0 0.0
    %642 = vmatprep.subr.mxu0 0.0
    %643 = vmatpush2.msra.mxu0 0.0
    %644 = vmatprep.subr.mxu0 0.0
    %645 = vmatpush2.msra.mxu0 0.0
    %646 = vmatprep.subr.mxu0 0.0
    %647 = vmatpush2.msra.mxu0 0.0
    %648 = vmatprep.subr.mxu0 0.0
    %649 = vmatpush2.msra.mxu0 0.0
    %650 = vmatprep.subr.mxu0 0.0
    %651 = vmatpush2.msra.mxu0 0.0
    %652 = vmatprep.subr.mxu0 0.0
    %653 = vmatpush2.msra.mxu0 0.0
    %654 = vmatprep.subr.mxu0 0.0
    %655 = vmatpush2.msra.mxu0 0.0
    %656 = vmatprep.subr.mxu0 0.0
    %657 = vmatpush2.msra.mxu0 0.0
    %658 = vmatprep.subr.mxu0 0.0
    %659 = vmatpush2.msra.mxu0 0.0
    %660 = vmatprep.mubr.f32.mxu0 0.0
    %661 = vmatmul.mubr.f32.gmra.mxu0 %v594
    %v662 = vpop.f32.mrf.mxu0
    %v663 = vadd.f32 %v590, %v662
    %v664 = vpop.f32.mrf.mxu0
    %665 = vdwg.mxu0
    %666 = vrot.lane.b32.xlu0 %v168, 112
    %v667 = vpop.permute.xlu0 %666
    %668 = vrot.lane.b32.xlu0 %v168, 80
    %v669 = vpop.permute.xlu0 %668
    %v670 = vsel %vm184, %v667, 0
    %v672 = vsel %vm184, %v669, 0
    %674 = vmatprep.subr.mxu0 0.0
    %675 = vmatpush1.xpose.msra.mxu0 0.0
    %676 = vmatprep.subr.mxu0 0.0
    %677 = vmatpush1.xpose.msra.mxu0 0.0
    %678 = vmatprep.subr.mxu0 0.0
    %679 = vmatpush1.xpose.msra.mxu0 0.0
    %680 = vmatprep.subr.mxu0 0.0
    %681 = vmatpush1.xpose.msra.mxu0 0.0
    %682 = vmatprep.subr.mxu0 0.0
    %683 = vmatpush1.xpose.msra.mxu0 0.0
    %684 = vmatprep.subr.mxu0 0.0
    %685 = vmatpush1.xpose.msra.mxu0 0.0
    %686 = vmatprep.subr.mxu0 0.0
    %687 = vmatpush1.xpose.msra.mxu0 0.0
    %688 = vmatprep.subr.mxu0 0.0
    %689 = vmatpush1.xpose.msra.mxu0 0.0
    %690 = vmatprep.subr.mxu0 0.0
    %691 = vmatpush1.xpose.msra.mxu0 0.0
    %692 = vmatprep.subr.mxu0 0.0
    %693 = vmatpush1.xpose.msra.mxu0 0.0
    %694 = vmatprep.subr.mxu0 0.0
    %695 = vmatpush1.xpose.msra.mxu0 0.0
    %696 = vmatprep.subr.mxu0 0.0
    %697 = vmatpush1.xpose.msra.mxu0 0.0
    %698 = vmatprep.subr.mxu0 0.0
    %699 = vmatpush1.xpose.msra.mxu0 0.0
    %700 = vmatprep.subr.mxu0 0.0
    %701 = vmatpush1.xpose.msra.mxu0 0.0
    %702 = vmatprep.subr.mxu0 0.0
    %703 = vmatpush1.xpose.msra.mxu0 0.0
    %704 = vmatprep.subr.mxu0 0.0
    %705 = vmatpush1.xpose.msra.mxu0 %v672
    %706 = vmatprep.subr.mxu0 0.0
    %707 = vmatpush2.xpose.msra.mxu0 0.0
    %708 = vmatprep.subr.mxu0 0.0
    %709 = vmatpush2.xpose.msra.mxu0 0.0
    %710 = vmatprep.subr.mxu0 0.0
    %711 = vmatpush2.xpose.msra.mxu0 0.0
    %712 = vmatprep.subr.mxu0 0.0
    %713 = vmatpush2.xpose.msra.mxu0 0.0
    %714 = vmatprep.subr.mxu0 0.0
    %715 = vmatpush2.xpose.msra.mxu0 0.0
    %716 = vmatprep.subr.mxu0 0.0
    %717 = vmatpush2.xpose.msra.mxu0 0.0
    %718 = vmatprep.subr.mxu0 0.0
    %719 = vmatpush2.xpose.msra.mxu0 0.0
    %720 = vmatprep.subr.mxu0 0.0
    %721 = vmatpush2.xpose.msra.mxu0 0.0
    %722 = vmatprep.subr.mxu0 0.0
    %723 = vmatpush2.xpose.msra.mxu0 0.0
    %724 = vmatprep.subr.mxu0 0.0
    %725 = vmatpush2.xpose.msra.mxu0 0.0
    %726 = vmatprep.subr.mxu0 0.0
    %727 = vmatpush2.xpose.msra.mxu0 0.0
    %728 = vmatprep.subr.mxu0 0.0
    %729 = vmatpush2.xpose.msra.mxu0 0.0
    %730 = vmatprep.subr.mxu0 0.0
    %731 = vmatpush2.xpose.msra.mxu0 0.0
    %732 = vmatprep.subr.mxu0 0.0
    %733 = vmatpush2.xpose.msra.mxu0 0.0
    %734 = vmatprep.subr.mxu0 0.0
    %735 = vmatpush2.xpose.msra.mxu0 0.0
    %736 = vmatprep.subr.mxu0 0.0
    %737 = vmatpush2.xpose.msra.mxu0 0.0
    %738 = vmatprep.mubr.f32.mxu0 0.0
    %739 = vmatmul.mubr.f32.gmra.mxu0 %v670
    %v740 = vpop.f32.mrf.mxu0
    %v741 = vadd.f32 0.0, %v740
    %v742 = vpop.f32.mrf.mxu0
    %743 = vdwg.mxu0
    %v744 = vmul.f32 %v741, 0.35355338
    %v745 = vsel %vm264, -1e+09, %v744
    %v746 = vsel %vm184, %v745, -inf
    %747 = vmax.xlane.f32.xlu0 %v746
    %v748 = vpop.xlane.xlu0 %747
    %v749 = vsub.f32 %v745, %v748
    %v750 = vmul.f32 %v749, 1.442695
    %v751 = vpow.pop %v750
    %v752 = vsel %vm184, %v751, 0.0
    %753 = vadd.xlane.f32.xlu0 %v752
    %v754 = vpop.xlane.xlu0 %753
    %v755 = vrcp.pop %v754
    %v756 = vmul.f32 %v751, %v755
    %757 = vrot.lane.b32.xlu0 %v168, 48
    %v758 = vpop.permute.xlu0 %757
    %v761 = vsel %vm184, %v756, 0
    %763 = vmatprep.subr.mxu0 0.0
    %764 = vmatpush1.msra.mxu0 0.0
    %765 = vmatprep.subr.mxu0 0.0
    %766 = vmatpush1.msra.mxu0 0.0
    %767 = vmatprep.subr.mxu0 0.0
    %768 = vmatpush1.msra.mxu0 0.0
    %769 = vmatprep.subr.mxu0 0.0
    %770 = vmatpush1.msra.mxu0 0.0
    %771 = vmatprep.subr.mxu0 0.0
    %772 = vmatpush1.msra.mxu0 0.0
    %773 = vmatprep.subr.mxu0 0.0
    %774 = vmatpush1.msra.mxu0 0.0
    %775 = vmatprep.subr.mxu0 0.0
    %776 = vmatpush1.msra.mxu0 0.0
    %777 = vmatprep.subr.mxu0 0.0
    %778 = vmatpush1.msra.mxu0 0.0
    %779 = vmatprep.subr.mxu0 0.0
    %780 = vmatpush1.msra.mxu0 0.0
    %781 = vmatprep.subr.mxu0 0.0
    %782 = vmatpush1.msra.mxu0 0.0
    %783 = vmatprep.subr.mxu0 0.0
    %784 = vmatpush1.msra.mxu0 0.0
    %785 = vmatprep.subr.mxu0 0.0
    %786 = vmatpush1.msra.mxu0 0.0
    %787 = vmatprep.subr.mxu0 0.0
    %788 = vmatpush1.msra.mxu0 0.0
    %789 = vmatprep.subr.mxu0 0.0
    %790 = vmatpush1.msra.mxu0 0.0
    %791 = vmatprep.subr.mxu0 0.0
    %792 = vmatpush1.msra.mxu0 0.0
    %793 = vmatprep.subr.mxu0 0.0
    %794 = vmatpush1.msra.mxu0 %v758
    %795 = vmatprep.subr.mxu0 0.0
    %796 = vmatpush2.msra.mxu0 0.0
    %797 = vmatprep.subr.mxu0 0.0
    %798 = vmatpush2.msra.mxu0 0.0
    %799 = vmatprep.subr.mxu0 0.0
    %800 = vmatpush2.msra.mxu0 0.0
    %801 = vmatprep.subr.mxu0 0.0
    %802 = vmatpush2.msra.mxu0 0.0
    %803 = vmatprep.subr.mxu0 0.0
    %804 = vmatpush2.msra.mxu0 0.0
    %805 = vmatprep.subr.mxu0 0.0
    %806 = vmatpush2.msra.mxu0 0.0
    %807 = vmatprep.subr.mxu0 0.0
    %808 = vmatpush2.msra.mxu0 0.0
    %809 = vmatprep.subr.mxu0 0.0
    %810 = vmatpush2.msra.mxu0 0.0
    %811 = vmatprep.subr.mxu0 0.0
    %812 = vmatpush2.msra.mxu0 0.0
    %813 = vmatprep.subr.mxu0 0.0
    %814 = vmatpush2.msra.mxu0 0.0
    %815 = vmatprep.subr.mxu0 0.0
    %816 = vmatpush2.msra.mxu0 0.0
    %817 = vmatprep.subr.mxu0 0.0
    %818 = vmatpush2.msra.mxu0 0.0
    %819 = vmatprep.subr.mxu0 0.0
    %820 = vmatpush2.msra.mxu0 0.0
    %821 = vmatprep.subr.mxu0 0.0
    %822 = vmatpush2.msra.mxu0 0.0
    %823 = vmatprep.subr.mxu0 0.0
    %824 = vmatpush2.msra.mxu0 0.0
    %825 = vmatprep.subr.mxu0 0.0
    %826 = vmatpush2.msra.mxu0 0.0
    %827 = vmatprep.mubr.f32.mxu0 0.0
    %828 = vmatmul.mubr.f32.gmra.mxu0 %v761
    %v829 = vpop.f32.mrf.mxu0
    %v830 = vadd.f32 0.0, %v829
    %v831 = vpop.f32.mrf.mxu0
    %832 = vdwg.mxu0
    %v834 = vsel %vm184, %v830, 0
    %836 = vmatprep.subr.mxu0 0.0
    %837 = vmatpush1.msra.mxu0 0.0
    %838 = vmatprep.subr.mxu0 0.0
    %839 = vmatpush1.msra.mxu0 0.0
    %840 = vmatprep.subr.mxu0 0.0
    %841 = vmatpush1.msra.mxu0 0.0
    %842 = vmatprep.subr.mxu0 0.0
    %843 = vmatpush1.msra.mxu0 0.0
    %844 = vmatprep.subr.mxu0 0.0
    %845 = vmatpush1.msra.mxu0 0.0
    %846 = vmatprep.subr.mxu0 0.0
    %847 = vmatpush1.msra.mxu0 0.0
    %848 = vmatprep.subr.mxu0 0.0
    %849 = vmatpush1.msra.mxu0 0.0
    %850 = vmatprep.subr.mxu0 0.0
    %851 = vmatpush1.msra.mxu0 0.0
    %852 = vmatprep.subr.mxu0 0.0
    %853 = vmatpush1.msra.mxu0 0.0
    %854 = vmatprep.subr.mxu0 0.0
    %855 = vmatpush1.msra.mxu0 0.0
    %856 = vmatprep.subr.mxu0 0.0
    %857 = vmatpush1.msra.mxu0 0.0
    %858 = vmatprep.subr.mxu0 0.0
    %859 = vmatpush1.msra.mxu0 0.0
    %860 = vmatprep.subr.mxu0 0.0
    %861 = vmatpush1.msra.mxu0 0.0
    %862 = vmatprep.subr.mxu0 0.0
    %863 = vmatpush1.msra.mxu0 0.0
    %864 = vmatprep.subr.mxu0 0.0
    %865 = vmatpush1.msra.mxu0 0.0
    %866 = vmatprep.subr.mxu0 0.0
    %867 = vmatpush1.msra.mxu0 %v178
    %868 = vmatprep.subr.mxu0 0.0
    %869 = vmatpush2.msra.mxu0 0.0
    %870 = vmatprep.subr.mxu0 0.0
    %871 = vmatpush2.msra.mxu0 0.0
    %872 = vmatprep.subr.mxu0 0.0
    %873 = vmatpush2.msra.mxu0 0.0
    %874 = vmatprep.subr.mxu0 0.0
    %875 = vmatpush2.msra.mxu0 0.0
    %876 = vmatprep.subr.mxu0 0.0
    %877 = vmatpush2.msra.mxu0 0.0
    %878 = vmatprep.subr.mxu0 0.0
    %879 = vmatpush2.msra.mxu0 0.0
    %880 = vmatprep.subr.mxu0 0.0
    %881 = vmatpush2.msra.mxu0 0.0
    %882 = vmatprep.subr.mxu0 0.0
    %883 = vmatpush2.msra.mxu0 0.0
    %884 = vmatprep.subr.mxu0 0.0
    %885 = vmatpush2.msra.mxu0 0.0
    %886 = vmatprep.subr.mxu0 0.0
    %887 = vmatpush2.msra.mxu0 0.0
    %888 = vmatprep.subr.mxu0 0.0
    %889 = vmatpush2.msra.mxu0 0.0
    %890 = vmatprep.subr.mxu0 0.0
    %891 = vmatpush2.msra.mxu0 0.0
    %892 = vmatprep.subr.mxu0 0.0
    %893 = vmatpush2.msra.mxu0 0.0
    %894 = vmatprep.subr.mxu0 0.0
    %895 = vmatpush2.msra.mxu0 0.0
    %896 = vmatprep.subr.mxu0 0.0
    %897 = vmatpush2.msra.mxu0 0.0
    %898 = vmatprep.subr.mxu0 0.0
    %899 = vmatpush2.msra.mxu0 0.0
    %900 = vmatprep.mubr.f32.mxu0 0.0
    %901 = vmatmul.mubr.f32.gmra.mxu0 %v834
    %v902 = vpop.f32.mrf.mxu0
    %v903 = vadd.f32 0.0, %v902
    %v904 = vpop.f32.mrf.mxu0
    %905 = vdwg.mxu0
    %v906 = vadd.f32 %v663, %v903
    %907 = vrot.lane.b32.xlu0 %v168, 104
    %v908 = vpop.permute.xlu0 %907
    %909 = vrot.lane.b32.xlu0 %v168, 72
    %v910 = vpop.permute.xlu0 %909
    %v911 = vsel %vm184, %v908, 0
    %v913 = vsel %vm184, %v910, 0
    %915 = vmatprep.subr.mxu0 0.0
    %916 = vmatpush1.xpose.msra.mxu0 0.0
    %917 = vmatprep.subr.mxu0 0.0
    %918 = vmatpush1.xpose.msra.mxu0 0.0
    %919 = vmatprep.subr.mxu0 0.0
    %920 = vmatpush1.xpose.msra.mxu0 0.0
    %921 = vmatprep.subr.mxu0 0.0
    %922 = vmatpush1.xpose.msra.mxu0 0.0
    %923 = vmatprep.subr.mxu0 0.0
    %924 = vmatpush1.xpose.msra.mxu0 0.0
    %925 = vmatprep.subr.mxu0 0.0
    %926 = vmatpush1.xpose.msra.mxu0 0.0
    %927 = vmatprep.subr.mxu0 0.0
    %928 = vmatpush1.xpose.msra.mxu0 0.0
    %929 = vmatprep.subr.mxu0 0.0
    %930 = vmatpush1.xpose.msra.mxu0 0.0
    %931 = vmatprep.subr.mxu0 0.0
    %932 = vmatpush1.xpose.msra.mxu0 0.0
    %933 = vmatprep.subr.mxu0 0.0
    %934 = vmatpush1.xpose.msra.mxu0 0.0
    %935 = vmatprep.subr.mxu0 0.0
    %936 = vmatpush1.xpose.msra.mxu0 0.0
    %937 = vmatprep.subr.mxu0 0.0
    %938 = vmatpush1.xpose.msra.mxu0 0.0
    %939 = vmatprep.subr.mxu0 0.0
    %940 = vmatpush1.xpose.msra.mxu0 0.0
    %941 = vmatprep.subr.mxu0 0.0
    %942 = vmatpush1.xpose.msra.mxu0 0.0
    %943 = vmatprep.subr.mxu0 0.0
    %944 = vmatpush1.xpose.msra.mxu0 0.0
    %945 = vmatprep.subr.mxu0 0.0
    %946 = vmatpush1.xpose.msra.mxu0 %v913
    %947 = vmatprep.subr.mxu0 0.0
    %948 = vmatpush2.xpose.msra.mxu0 0.0
    %949 = vmatprep.subr.mxu0 0.0
    %950 = vmatpush2.xpose.msra.mxu0 0.0
    %951 = vmatprep.subr.mxu0 0.0
    %952 = vmatpush2.xpose.msra.mxu0 0.0
    %953 = vmatprep.subr.mxu0 0.0
    %954 = vmatpush2.xpose.msra.mxu0 0.0
    %955 = vmatprep.subr.mxu0 0.0
    %956 = vmatpush2.xpose.msra.mxu0 0.0
    %957 = vmatprep.subr.mxu0 0.0
    %958 = vmatpush2.xpose.msra.mxu0 0.0
    %959 = vmatprep.subr.mxu0 0.0
    %960 = vmatpush2.xpose.msra.mxu0 0.0
    %961 = vmatprep.subr.mxu0 0.0
    %962 = vmatpush2.xpose.msra.mxu0 0.0
    %963 = vmatprep.subr.mxu0 0.0
    %964 = vmatpush2.xpose.msra.mxu0 0.0
    %965 = vmatprep.subr.mxu0 0.0
    %966 = vmatpush2.xpose.msra.mxu0 0.0
    %967 = vmatprep.subr.mxu0 0.0
    %968 = vmatpush2.xpose.msra.mxu0 0.0
    %969 = vmatprep.subr.mxu0 0.0
    %970 = vmatpush2.xpose.msra.mxu0 0.0
    %971 = vmatprep.subr.mxu0 0.0
    %972 = vmatpush2.xpose.msra.mxu0 0.0
    %973 = vmatprep.subr.mxu0 0.0
    %974 = vmatpush2.xpose.msra.mxu0 0.0
    %975 = vmatprep.subr.mxu0 0.0
    %976 = vmatpush2.xpose.msra.mxu0 0.0
    %977 = vmatprep.subr.mxu0 0.0
    %978 = vmatpush2.xpose.msra.mxu0 0.0
    %979 = vmatprep.mubr.f32.mxu0 0.0
    %980 = vmatmul.mubr.f32.gmra.mxu0 %v911
    %v981 = vpop.f32.mrf.mxu0
    %v982 = vadd.f32 0.0, %v981
    %v983 = vpop.f32.mrf.mxu0
    %984 = vdwg.mxu0
    %v985 = vmul.f32 %v982, 0.35355338
    %v986 = vsel %vm264, -1e+09, %v985
    %v987 = vsel %vm184, %v986, -inf
    %988 = vmax.xlane.f32.xlu0 %v987
    %v989 = vpop.xlane.xlu0 %988
    %v990 = vsub.f32 %v986, %v989
    %v991 = vmul.f32 %v990, 1.442695
    %v992 = vpow.pop %v991
    %v993 = vsel %vm184, %v992, 0.0
    %994 = vadd.xlane.f32.xlu0 %v993
    %v995 = vpop.xlane.xlu0 %994
    %v996 = vrcp.pop %v995
    %v997 = vmul.f32 %v992, %v996
    %998 = vrot.lane.b32.xlu0 %v168, 40
    %v999 = vpop.permute.xlu0 %998
    %v1002 = vsel %vm184, %v997, 0
    %1004 = vmatprep.subr.mxu0 0.0
    %1005 = vmatpush1.msra.mxu0 0.0
    %1006 = vmatprep.subr.mxu0 0.0
    %1007 = vmatpush1.msra.mxu0 0.0
    %1008 = vmatprep.subr.mxu0 0.0
    %1009 = vmatpush1.msra.mxu0 0.0
    %1010 = vmatprep.subr.mxu0 0.0
    %1011 = vmatpush1.msra.mxu0 0.0
    %1012 = vmatprep.subr.mxu0 0.0
    %1013 = vmatpush1.msra.mxu0 0.0
    %1014 = vmatprep.subr.mxu0 0.0
    %1015 = vmatpush1.msra.mxu0 0.0
    %1016 = vmatprep.subr.mxu0 0.0
    %1017 = vmatpush1.msra.mxu0 0.0
    %1018 = vmatprep.subr.mxu0 0.0
    %1019 = vmatpush1.msra.mxu0 0.0
    %1020 = vmatprep.subr.mxu0 0.0
    %1021 = vmatpush1.msra.mxu0 0.0
    %1022 = vmatprep.subr.mxu0 0.0
    %1023 = vmatpush1.msra.mxu0 0.0
    %1024 = vmatprep.subr.mxu0 0.0
    %1025 = vmatpush1.msra.mxu0 0.0
    %1026 = vmatprep.subr.mxu0 0.0
    %1027 = vmatpush1.msra.mxu0 0.0
    %1028 = vmatprep.subr.mxu0 0.0
    %1029 = vmatpush1.msra.mxu0 0.0
    %1030 = vmatprep.subr.mxu0 0.0
    %1031 = vmatpush1.msra.mxu0 0.0
    %1032 = vmatprep.subr.mxu0 0.0
    %1033 = vmatpush1.msra.mxu0 0.0
    %1034 = vmatprep.subr.mxu0 0.0
    %1035 = vmatpush1.msra.mxu0 %v999
    %1036 = vmatprep.subr.mxu0 0.0
    %1037 = vmatpush2.msra.mxu0 0.0
    %1038 = vmatprep.subr.mxu0 0.0
    %1039 = vmatpush2.msra.mxu0 0.0
    %1040 = vmatprep.subr.mxu0 0.0
    %1041 = vmatpush2.msra.mxu0 0.0
    %1042 = vmatprep.subr.mxu0 0.0
    %1043 = vmatpush2.msra.mxu0 0.0
    %1044 = vmatprep.subr.mxu0 0.0
    %1045 = vmatpush2.msra.mxu0 0.0
    %1046 = vmatprep.subr.mxu0 0.0
    %1047 = vmatpush2.msra.mxu0 0.0
    %1048 = vmatprep.subr.mxu0 0.0
    %1049 = vmatpush2.msra.mxu0 0.0
    %1050 = vmatprep.subr.mxu0 0.0
    %1051 = vmatpush2.msra.mxu0 0.0
    %1052 = vmatprep.subr.mxu0 0.0
    %1053 = vmatpush2.msra.mxu0 0.0
    %1054 = vmatprep.subr.mxu0 0.0
    %1055 = vmatpush2.msra.mxu0 0.0
    %1056 = vmatprep.subr.mxu0 0.0
    %1057 = vmatpush2.msra.mxu0 0.0
    %1058 = vmatprep.subr.mxu0 0.0
    %1059 = vmatpush2.msra.mxu0 0.0
    %1060 = vmatprep.subr.mxu0 0.0
    %1061 = vmatpush2.msra.mxu0 0.0
    %1062 = vmatprep.subr.mxu0 0.0
    %1063 = vmatpush2.msra.mxu0 0.0
    %1064 = vmatprep.subr.mxu0 0.0
    %1065 = vmatpush2.msra.mxu0 0.0
    %1066 = vmatprep.subr.mxu0 0.0
    %1067 = vmatpush2.msra.mxu0 0.0
    %1068 = vmatprep.mubr.f32.mxu0 0.0
    %1069 = vmatmul.mubr.f32.gmra.mxu0 %v1002
    %v1070 = vpop.f32.mrf.mxu0
    %v1071 = vadd.f32 0.0, %v1070
    %v1072 = vpop.f32.mrf.mxu0
    %1073 = vdwg.mxu0
    %v1075 = vsel %vm184, %v1071, 0
    %1077 = vmatprep.subr.mxu0 0.0
    %1078 = vmatpush1.msra.mxu0 0.0
    %1079 = vmatprep.subr.mxu0 0.0
    %1080 = vmatpush1.msra.mxu0 0.0
    %1081 = vmatprep.subr.mxu0 0.0
    %1082 = vmatpush1.msra.mxu0 0.0
    %1083 = vmatprep.subr.mxu0 0.0
    %1084 = vmatpush1.msra.mxu0 0.0
    %1085 = vmatprep.subr.mxu0 0.0
    %1086 = vmatpush1.msra.mxu0 0.0
    %1087 = vmatprep.subr.mxu0 0.0
    %1088 = vmatpush1.msra.mxu0 0.0
    %1089 = vmatprep.subr.mxu0 0.0
    %1090 = vmatpush1.msra.mxu0 0.0
    %1091 = vmatprep.subr.mxu0 0.0
    %1092 = vmatpush1.msra.mxu0 0.0
    %1093 = vmatprep.subr.mxu0 0.0
    %1094 = vmatpush1.msra.mxu0 0.0
    %1095 = vmatprep.subr.mxu0 0.0
    %1096 = vmatpush1.msra.mxu0 0.0
    %1097 = vmatprep.subr.mxu0 0.0
    %1098 = vmatpush1.msra.mxu0 0.0
    %1099 = vmatprep.subr.mxu0 0.0
    %1100 = vmatpush1.msra.mxu0 0.0
    %1101 = vmatprep.subr.mxu0 0.0
    %1102 = vmatpush1.msra.mxu0 0.0
    %1103 = vmatprep.subr.mxu0 0.0
    %1104 = vmatpush1.msra.mxu0 0.0
    %1105 = vmatprep.subr.mxu0 0.0
    %1106 = vmatpush1.msra.mxu0 0.0
    %1107 = vmatprep.subr.mxu0 0.0
    %1108 = vmatpush1.msra.mxu0 %v179
    %1109 = vmatprep.subr.mxu0 0.0
    %1110 = vmatpush2.msra.mxu0 0.0
    %1111 = vmatprep.subr.mxu0 0.0
    %1112 = vmatpush2.msra.mxu0 0.0
    %1113 = vmatprep.subr.mxu0 0.0
    %1114 = vmatpush2.msra.mxu0 0.0
    %1115 = vmatprep.subr.mxu0 0.0
    %1116 = vmatpush2.msra.mxu0 0.0
    %1117 = vmatprep.subr.mxu0 0.0
    %1118 = vmatpush2.msra.mxu0 0.0
    %1119 = vmatprep.subr.mxu0 0.0
    %1120 = vmatpush2.msra.mxu0 0.0
    %1121 = vmatprep.subr.mxu0 0.0
    %1122 = vmatpush2.msra.mxu0 0.0
    %1123 = vmatprep.subr.mxu0 0.0
    %1124 = vmatpush2.msra.mxu0 0.0
    %1125 = vmatprep.subr.mxu0 0.0
    %1126 = vmatpush2.msra.mxu0 0.0
    %1127 = vmatprep.subr.mxu0 0.0
    %1128 = vmatpush2.msra.mxu0 0.0
    %1129 = vmatprep.subr.mxu0 0.0
    %1130 = vmatpush2.msra.mxu0 0.0
    %1131 = vmatprep.subr.mxu0 0.0
    %1132 = vmatpush2.msra.mxu0 0.0
    %1133 = vmatprep.subr.mxu0 0.0
    %1134 = vmatpush2.msra.mxu0 0.0
    %1135 = vmatprep.subr.mxu0 0.0
    %1136 = vmatpush2.msra.mxu0 0.0
    %1137 = vmatprep.subr.mxu0 0.0
    %1138 = vmatpush2.msra.mxu0 0.0
    %1139 = vmatprep.subr.mxu0 0.0
    %1140 = vmatpush2.msra.mxu0 0.0
    %1141 = vmatprep.mubr.f32.mxu0 0.0
    %1142 = vmatmul.mubr.f32.gmra.mxu0 %v1075
    %v1143 = vpop.f32.mrf.mxu0
    %v1144 = vadd.f32 0.0, %v1143
    %v1145 = vpop.f32.mrf.mxu0
    %1146 = vdwg.mxu0
    %v1147 = vadd.f32 %v906, %v1144
    %vm1148 = vcmp.gt.f32.partialorder %v30, 0.5
    %1150 = vrot.lane.b32.xlu0 %v173, 96
    %v1151 = vpop.permute.xlu0 %1150
    %v1152 = vsel %vm184, %v173, 0
    %v1154 = vsel %vm184, %v1151, 0
    %1156 = vmatprep.subr.mxu0 0.0
    %1157 = vmatpush1.xpose.msra.mxu0 0.0
    %1158 = vmatprep.subr.mxu0 0.0
    %1159 = vmatpush1.xpose.msra.mxu0 0.0
    %1160 = vmatprep.subr.mxu0 0.0
    %1161 = vmatpush1.xpose.msra.mxu0 0.0
    %1162 = vmatprep.subr.mxu0 0.0
    %1163 = vmatpush1.xpose.msra.mxu0 0.0
    %1164 = vmatprep.subr.mxu0 0.0
    %1165 = vmatpush1.xpose.msra.mxu0 0.0
    %1166 = vmatprep.subr.mxu0 0.0
    %1167 = vmatpush1.xpose.msra.mxu0 0.0
    %1168 = vmatprep.subr.mxu0 0.0
    %1169 = vmatpush1.xpose.msra.mxu0 0.0
    %1170 = vmatprep.subr.mxu0 0.0
    %1171 = vmatpush1.xpose.msra.mxu0 0.0
    %1172 = vmatprep.subr.mxu0 0.0
    %1173 = vmatpush1.xpose.msra.mxu0 0.0
    %1174 = vmatprep.subr.mxu0 0.0
    %1175 = vmatpush1.xpose.msra.mxu0 0.0
    %1176 = vmatprep.subr.mxu0 0.0
    %1177 = vmatpush1.xpose.msra.mxu0 0.0
    %1178 = vmatprep.subr.mxu0 0.0
    %1179 = vmatpush1.xpose.msra.mxu0 0.0
    %1180 = vmatprep.subr.mxu0 0.0
    %1181 = vmatpush1.xpose.msra.mxu0 0.0
    %1182 = vmatprep.subr.mxu0 0.0
    %1183 = vmatpush1.xpose.msra.mxu0 0.0
    %1184 = vmatprep.subr.mxu0 0.0
    %1185 = vmatpush1.xpose.msra.mxu0 0.0
    %1186 = vmatprep.subr.mxu0 0.0
    %1187 = vmatpush1.xpose.msra.mxu0 %v1154
    %1188 = vmatprep.subr.mxu0 0.0
    %1189 = vmatpush2.xpose.msra.mxu0 0.0
    %1190 = vmatprep.subr.mxu0 0.0
    %1191 = vmatpush2.xpose.msra.mxu0 0.0
    %1192 = vmatprep.subr.mxu0 0.0
    %1193 = vmatpush2.xpose.msra.mxu0 0.0
    %1194 = vmatprep.subr.mxu0 0.0
    %1195 = vmatpush2.xpose.msra.mxu0 0.0
    %1196 = vmatprep.subr.mxu0 0.0
    %1197 = vmatpush2.xpose.msra.mxu0 0.0
    %1198 = vmatprep.subr.mxu0 0.0
    %1199 = vmatpush2.xpose.msra.mxu0 0.0
    %1200 = vmatprep.subr.mxu0 0.0
    %1201 = vmatpush2.xpose.msra.mxu0 0.0
    %1202 = vmatprep.subr.mxu0 0.0
    %1203 = vmatpush2.xpose.msra.mxu0 0.0
    %1204 = vmatprep.subr.mxu0 0.0
    %1205 = vmatpush2.xpose.msra.mxu0 0.0
    %1206 = vmatprep.subr.mxu0 0.0
    %1207 = vmatpush2.xpose.msra.mxu0 0.0
    %1208 = vmatprep.subr.mxu0 0.0
    %1209 = vmatpush2.xpose.msra.mxu0 0.0
    %1210 = vmatprep.subr.mxu0 0.0
    %1211 = vmatpush2.xpose.msra.mxu0 0.0
    %1212 = vmatprep.subr.mxu0 0.0
    %1213 = vmatpush2.xpose.msra.mxu0 0.0
    %1214 = vmatprep.subr.mxu0 0.0
    %1215 = vmatpush2.xpose.msra.mxu0 0.0
    %1216 = vmatprep.subr.mxu0 0.0
    %1217 = vmatpush2.xpose.msra.mxu0 0.0
    %1218 = vmatprep.subr.mxu0 0.0
    %1219 = vmatpush2.xpose.msra.mxu0 0.0
    %1220 = vmatprep.mubr.f32.mxu0 0.0
    %1221 = vmatmul.mubr.f32.gmra.mxu0 %v1152
    %v1222 = vpop.f32.mrf.mxu0
    %v1223 = vadd.f32 0.0, %v1222
    %v1224 = vpop.f32.mrf.mxu0
    %1225 = vdwg.mxu0
    %v1226 = vmul.f32 %v1223, 0.35355338
    %v1227 = vsel %vm1148, 1, 0
    %1228 = vset.pattern.permute.xlu0 0
    %1229 = vperm.xlu0 %1228, %v1227
    %v1230 = vpop.permute.xlu0 %1229
    %vm1231 = vcmp.eq.s32.totalorder %v1230, 1
    %v1232 = vsel %vm1231, -1e+09, %v1226
    %v1233 = vsel %vm184, %v1232, -inf
    %1234 = vmax.xlane.f32.xlu0 %v1233
    %v1235 = vpop.xlane.xlu0 %1234
    %v1236 = vsub.f32 %v1232, %v1235
    %v1237 = vmul.f32 %v1236, 1.442695
    %v1238 = vpow.pop %v1237
    %v1239 = vsel %vm184, %v1238, 0.0
    %1240 = vadd.xlane.f32.xlu0 %v1239
    %v1241 = vpop.xlane.xlu0 %1240
    %v1242 = vrcp.pop %v1241
    %v1243 = vmul.f32 %v1238, %v1242
    %1244 = vrot.lane.b32.xlu0 %v173, 64
    %v1245 = vpop.permute.xlu0 %1244
    %v1248 = vsel %vm184, %v1243, 0
    %1250 = vmatprep.subr.mxu0 0.0
    %1251 = vmatpush1.msra.mxu0 0.0
    %1252 = vmatprep.subr.mxu0 0.0
    %1253 = vmatpush1.msra.mxu0 0.0
    %1254 = vmatprep.subr.mxu0 0.0
    %1255 = vmatpush1.msra.mxu0 0.0
    %1256 = vmatprep.subr.mxu0 0.0
    %1257 = vmatpush1.msra.mxu0 0.0
    %1258 = vmatprep.subr.mxu0 0.0
    %1259 = vmatpush1.msra.mxu0 0.0
    %1260 = vmatprep.subr.mxu0 0.0
    %1261 = vmatpush1.msra.mxu0 0.0
    %1262 = vmatprep.subr.mxu0 0.0
    %1263 = vmatpush1.msra.mxu0 0.0
    %1264 = vmatprep.subr.mxu0 0.0
    %1265 = vmatpush1.msra.mxu0 0.0
    %1266 = vmatprep.subr.mxu0 0.0
    %1267 = vmatpush1.msra.mxu0 0.0
    %1268 = vmatprep.subr.mxu0 0.0
    %1269 = vmatpush1.msra.mxu0 0.0
    %1270 = vmatprep.subr.mxu0 0.0
    %1271 = vmatpush1.msra.mxu0 0.0
    %1272 = vmatprep.subr.mxu0 0.0
    %1273 = vmatpush1.msra.mxu0 0.0
    %1274 = vmatprep.subr.mxu0 0.0
    %1275 = vmatpush1.msra.mxu0 0.0
    %1276 = vmatprep.subr.mxu0 0.0
    %1277 = vmatpush1.msra.mxu0 0.0
    %1278 = vmatprep.subr.mxu0 0.0
    %1279 = vmatpush1.msra.mxu0 0.0
    %1280 = vmatprep.subr.mxu0 0.0
    %1281 = vmatpush1.msra.mxu0 %v1245
    %1282 = vmatprep.subr.mxu0 0.0
    %1283 = vmatpush2.msra.mxu0 0.0
    %1284 = vmatprep.subr.mxu0 0.0
    %1285 = vmatpush2.msra.mxu0 0.0
    %1286 = vmatprep.subr.mxu0 0.0
    %1287 = vmatpush2.msra.mxu0 0.0
    %1288 = vmatprep.subr.mxu0 0.0
    %1289 = vmatpush2.msra.mxu0 0.0
    %1290 = vmatprep.subr.mxu0 0.0
    %1291 = vmatpush2.msra.mxu0 0.0
    %1292 = vmatprep.subr.mxu0 0.0
    %1293 = vmatpush2.msra.mxu0 0.0
    %1294 = vmatprep.subr.mxu0 0.0
    %1295 = vmatpush2.msra.mxu0 0.0
    %1296 = vmatprep.subr.mxu0 0.0
    %1297 = vmatpush2.msra.mxu0 0.0
    %1298 = vmatprep.subr.mxu0 0.0
    %1299 = vmatpush2.msra.mxu0 0.0
    %1300 = vmatprep.subr.mxu0 0.0
    %1301 = vmatpush2.msra.mxu0 0.0
    %1302 = vmatprep.subr.mxu0 0.0
    %1303 = vmatpush2.msra.mxu0 0.0
    %1304 = vmatprep.subr.mxu0 0.0
    %1305 = vmatpush2.msra.mxu0 0.0
    %1306 = vmatprep.subr.mxu0 0.0
    %1307 = vmatpush2.msra.mxu0 0.0
    %1308 = vmatprep.subr.mxu0 0.0
    %1309 = vmatpush2.msra.mxu0 0.0
    %1310 = vmatprep.subr.mxu0 0.0
    %1311 = vmatpush2.msra.mxu0 0.0
    %1312 = vmatprep.subr.mxu0 0.0
    %1313 = vmatpush2.msra.mxu0 0.0
    %1314 = vmatprep.mubr.f32.mxu0 0.0
    %1315 = vmatmul.mubr.f32.gmra.mxu0 %v1248
    %v1316 = vpop.f32.mrf.mxu0
    %v1317 = vadd.f32 0.0, %v1316
    %v1318 = vpop.f32.mrf.mxu0
    %1319 = vdwg.mxu0
    %1320 = vrot.lane.b32.xlu0 %v173, 120
    %v1321 = vpop.permute.xlu0 %1320
    %1322 = vrot.lane.b32.xlu0 %v173, 88
    %v1323 = vpop.permute.xlu0 %1322
    %v1324 = vsel %vm184, %v1321, 0
    %v1326 = vsel %vm184, %v1323, 0
    %1328 = vmatprep.subr.mxu0 0.0
    %1329 = vmatpush1.xpose.msra.mxu0 0.0
    %1330 = vmatprep.subr.mxu0 0.0
    %1331 = vmatpush1.xpose.msra.mxu0 0.0
    %1332 = vmatprep.subr.mxu0 0.0
    %1333 = vmatpush1.xpose.msra.mxu0 0.0
    %1334 = vmatprep.subr.mxu0 0.0
    %1335 = vmatpush1.xpose.msra.mxu0 0.0
    %1336 = vmatprep.subr.mxu0 0.0
    %1337 = vmatpush1.xpose.msra.mxu0 0.0
    %1338 = vmatprep.subr.mxu0 0.0
    %1339 = vmatpush1.xpose.msra.mxu0 0.0
    %1340 = vmatprep.subr.mxu0 0.0
    %1341 = vmatpush1.xpose.msra.mxu0 0.0
    %1342 = vmatprep.subr.mxu0 0.0
    %1343 = vmatpush1.xpose.msra.mxu0 0.0
    %1344 = vmatprep.subr.mxu0 0.0
    %1345 = vmatpush1.xpose.msra.mxu0 0.0
    %1346 = vmatprep.subr.mxu0 0.0
    %1347 = vmatpush1.xpose.msra.mxu0 0.0
    %1348 = vmatprep.subr.mxu0 0.0
    %1349 = vmatpush1.xpose.msra.mxu0 0.0
    %1350 = vmatprep.subr.mxu0 0.0
    %1351 = vmatpush1.xpose.msra.mxu0 0.0
    %1352 = vmatprep.subr.mxu0 0.0
    %1353 = vmatpush1.xpose.msra.mxu0 0.0
    %1354 = vmatprep.subr.mxu0 0.0
    %1355 = vmatpush1.xpose.msra.mxu0 0.0
    %1356 = vmatprep.subr.mxu0 0.0
    %1357 = vmatpush1.xpose.msra.mxu0 0.0
    %1358 = vmatprep.subr.mxu0 0.0
    %1359 = vmatpush1.xpose.msra.mxu0 %v1326
    %1360 = vmatprep.subr.mxu0 0.0
    %1361 = vmatpush2.xpose.msra.mxu0 0.0
    %1362 = vmatprep.subr.mxu0 0.0
    %1363 = vmatpush2.xpose.msra.mxu0 0.0
    %1364 = vmatprep.subr.mxu0 0.0
    %1365 = vmatpush2.xpose.msra.mxu0 0.0
    %1366 = vmatprep.subr.mxu0 0.0
    %1367 = vmatpush2.xpose.msra.mxu0 0.0
    %1368 = vmatprep.subr.mxu0 0.0
    %1369 = vmatpush2.xpose.msra.mxu0 0.0
    %1370 = vmatprep.subr.mxu0 0.0
    %1371 = vmatpush2.xpose.msra.mxu0 0.0
    %1372 = vmatprep.subr.mxu0 0.0
    %1373 = vmatpush2.xpose.msra.mxu0 0.0
    %1374 = vmatprep.subr.mxu0 0.0
    %1375 = vmatpush2.xpose.msra.mxu0 0.0
    %1376 = vmatprep.subr.mxu0 0.0
    %1377 = vmatpush2.xpose.msra.mxu0 0.0
    %1378 = vmatprep.subr.mxu0 0.0
    %1379 = vmatpush2.xpose.msra.mxu0 0.0
    %1380 = vmatprep.subr.mxu0 0.0
    %1381 = vmatpush2.xpose.msra.mxu0 0.0
    %1382 = vmatprep.subr.mxu0 0.0
    %1383 = vmatpush2.xpose.msra.mxu0 0.0
    %1384 = vmatprep.subr.mxu0 0.0
    %1385 = vmatpush2.xpose.msra.mxu0 0.0
    %1386 = vmatprep.subr.mxu0 0.0
    %1387 = vmatpush2.xpose.msra.mxu0 0.0
    %1388 = vmatprep.subr.mxu0 0.0
    %1389 = vmatpush2.xpose.msra.mxu0 0.0
    %1390 = vmatprep.subr.mxu0 0.0
    %1391 = vmatpush2.xpose.msra.mxu0 0.0
    %1392 = vmatprep.mubr.f32.mxu0 0.0
    %1393 = vmatmul.mubr.f32.gmra.mxu0 %v1324
    %v1394 = vpop.f32.mrf.mxu0
    %v1395 = vadd.f32 0.0, %v1394
    %v1396 = vpop.f32.mrf.mxu0
    %1397 = vdwg.mxu0
    %v1398 = vmul.f32 %v1395, 0.35355338
    %v1399 = vsel %vm1231, -1e+09, %v1398
    %v1400 = vsel %vm184, %v1399, -inf
    %1401 = vmax.xlane.f32.xlu0 %v1400
    %v1402 = vpop.xlane.xlu0 %1401
    %v1403 = vsub.f32 %v1399, %v1402
    %v1404 = vmul.f32 %v1403, 1.442695
    %v1405 = vpow.pop %v1404
    %v1406 = vsel %vm184, %v1405, 0.0
    %1407 = vadd.xlane.f32.xlu0 %v1406
    %v1408 = vpop.xlane.xlu0 %1407
    %v1409 = vrcp.pop %v1408
    %v1410 = vmul.f32 %v1405, %v1409
    %1411 = vrot.lane.b32.xlu0 %v173, 56
    %v1412 = vpop.permute.xlu0 %1411
    %v1415 = vsel %vm184, %v1410, 0
    %1417 = vmatprep.subr.mxu0 0.0
    %1418 = vmatpush1.msra.mxu0 0.0
    %1419 = vmatprep.subr.mxu0 0.0
    %1420 = vmatpush1.msra.mxu0 0.0
    %1421 = vmatprep.subr.mxu0 0.0
    %1422 = vmatpush1.msra.mxu0 0.0
    %1423 = vmatprep.subr.mxu0 0.0
    %1424 = vmatpush1.msra.mxu0 0.0
    %1425 = vmatprep.subr.mxu0 0.0
    %1426 = vmatpush1.msra.mxu0 0.0
    %1427 = vmatprep.subr.mxu0 0.0
    %1428 = vmatpush1.msra.mxu0 0.0
    %1429 = vmatprep.subr.mxu0 0.0
    %1430 = vmatpush1.msra.mxu0 0.0
    %1431 = vmatprep.subr.mxu0 0.0
    %1432 = vmatpush1.msra.mxu0 0.0
    %1433 = vmatprep.subr.mxu0 0.0
    %1434 = vmatpush1.msra.mxu0 0.0
    %1435 = vmatprep.subr.mxu0 0.0
    %1436 = vmatpush1.msra.mxu0 0.0
    %1437 = vmatprep.subr.mxu0 0.0
    %1438 = vmatpush1.msra.mxu0 0.0
    %1439 = vmatprep.subr.mxu0 0.0
    %1440 = vmatpush1.msra.mxu0 0.0
    %1441 = vmatprep.subr.mxu0 0.0
    %1442 = vmatpush1.msra.mxu0 0.0
    %1443 = vmatprep.subr.mxu0 0.0
    %1444 = vmatpush1.msra.mxu0 0.0
    %1445 = vmatprep.subr.mxu0 0.0
    %1446 = vmatpush1.msra.mxu0 0.0
    %1447 = vmatprep.subr.mxu0 0.0
    %1448 = vmatpush1.msra.mxu0 %v1412
    %1449 = vmatprep.subr.mxu0 0.0
    %1450 = vmatpush2.msra.mxu0 0.0
    %1451 = vmatprep.subr.mxu0 0.0
    %1452 = vmatpush2.msra.mxu0 0.0
    %1453 = vmatprep.subr.mxu0 0.0
    %1454 = vmatpush2.msra.mxu0 0.0
    %1455 = vmatprep.subr.mxu0 0.0
    %1456 = vmatpush2.msra.mxu0 0.0
    %1457 = vmatprep.subr.mxu0 0.0
    %1458 = vmatpush2.msra.mxu0 0.0
    %1459 = vmatprep.subr.mxu0 0.0
    %1460 = vmatpush2.msra.mxu0 0.0
    %1461 = vmatprep.subr.mxu0 0.0
    %1462 = vmatpush2.msra.mxu0 0.0
    %1463 = vmatprep.subr.mxu0 0.0
    %1464 = vmatpush2.msra.mxu0 0.0
    %1465 = vmatprep.subr.mxu0 0.0
    %1466 = vmatpush2.msra.mxu0 0.0
    %1467 = vmatprep.subr.mxu0 0.0
    %1468 = vmatpush2.msra.mxu0 0.0
    %1469 = vmatprep.subr.mxu0 0.0
    %1470 = vmatpush2.msra.mxu0 0.0
    %1471 = vmatprep.subr.mxu0 0.0
    %1472 = vmatpush2.msra.mxu0 0.0
    %1473 = vmatprep.subr.mxu0 0.0
    %1474 = vmatpush2.msra.mxu0 0.0
    %1475 = vmatprep.subr.mxu0 0.0
    %1476 = vmatpush2.msra.mxu0 0.0
    %1477 = vmatprep.subr.mxu0 0.0
    %1478 = vmatpush2.msra.mxu0 0.0
    %1479 = vmatprep.subr.mxu0 0.0
    %1480 = vmatpush2.msra.mxu0 0.0
    %1481 = vmatprep.mubr.f32.mxu0 0.0
    %1482 = vmatmul.mubr.f32.gmra.mxu0 %v1415
    %v1483 = vpop.f32.mrf.mxu0
    %v1484 = vadd.f32 0.0, %v1483
    %v1485 = vpop.f32.mrf.mxu0
    %1486 = vdwg.mxu0
    %v1488 = vsel %vm184, %v1484, 0
    %1490 = vmatprep.subr.mxu0 0.0
    %1491 = vmatpush1.msra.mxu0 0.0
    %1492 = vmatprep.subr.mxu0 0.0
    %1493 = vmatpush1.msra.mxu0 0.0
    %1494 = vmatprep.subr.mxu0 0.0
    %1495 = vmatpush1.msra.mxu0 0.0
    %1496 = vmatprep.subr.mxu0 0.0
    %1497 = vmatpush1.msra.mxu0 0.0
    %1498 = vmatprep.subr.mxu0 0.0
    %1499 = vmatpush1.msra.mxu0 0.0
    %1500 = vmatprep.subr.mxu0 0.0
    %1501 = vmatpush1.msra.mxu0 0.0
    %1502 = vmatprep.subr.mxu0 0.0
    %1503 = vmatpush1.msra.mxu0 0.0
    %1504 = vmatprep.subr.mxu0 0.0
    %1505 = vmatpush1.msra.mxu0 0.0
    %1506 = vmatprep.subr.mxu0 0.0
    %1507 = vmatpush1.msra.mxu0 0.0
    %1508 = vmatprep.subr.mxu0 0.0
    %1509 = vmatpush1.msra.mxu0 0.0
    %1510 = vmatprep.subr.mxu0 0.0
    %1511 = vmatpush1.msra.mxu0 0.0
    %1512 = vmatprep.subr.mxu0 0.0
    %1513 = vmatpush1.msra.mxu0 0.0
    %1514 = vmatprep.subr.mxu0 0.0
    %1515 = vmatpush1.msra.mxu0 0.0
    %1516 = vmatprep.subr.mxu0 0.0
    %1517 = vmatpush1.msra.mxu0 0.0
    %1518 = vmatprep.subr.mxu0 0.0
    %1519 = vmatpush1.msra.mxu0 0.0
    %1520 = vmatprep.subr.mxu0 0.0
    %1521 = vmatpush1.msra.mxu0 %v177
    %1522 = vmatprep.subr.mxu0 0.0
    %1523 = vmatpush2.msra.mxu0 0.0
    %1524 = vmatprep.subr.mxu0 0.0
    %1525 = vmatpush2.msra.mxu0 0.0
    %1526 = vmatprep.subr.mxu0 0.0
    %1527 = vmatpush2.msra.mxu0 0.0
    %1528 = vmatprep.subr.mxu0 0.0
    %1529 = vmatpush2.msra.mxu0 0.0
    %1530 = vmatprep.subr.mxu0 0.0
    %1531 = vmatpush2.msra.mxu0 0.0
    %1532 = vmatprep.subr.mxu0 0.0
    %1533 = vmatpush2.msra.mxu0 0.0
    %1534 = vmatprep.subr.mxu0 0.0
    %1535 = vmatpush2.msra.mxu0 0.0
    %1536 = vmatprep.subr.mxu0 0.0
    %1537 = vmatpush2.msra.mxu0 0.0
    %1538 = vmatprep.subr.mxu0 0.0
    %1539 = vmatpush2.msra.mxu0 0.0
    %1540 = vmatprep.subr.mxu0 0.0
    %1541 = vmatpush2.msra.mxu0 0.0
    %1542 = vmatprep.subr.mxu0 0.0
    %1543 = vmatpush2.msra.mxu0 0.0
    %1544 = vmatprep.subr.mxu0 0.0
    %1545 = vmatpush2.msra.mxu0 0.0
    %1546 = vmatprep.subr.mxu0 0.0
    %1547 = vmatpush2.msra.mxu0 0.0
    %1548 = vmatprep.subr.mxu0 0.0
    %1549 = vmatpush2.msra.mxu0 0.0
    %1550 = vmatprep.subr.mxu0 0.0
    %1551 = vmatpush2.msra.mxu0 0.0
    %1552 = vmatprep.subr.mxu0 0.0
    %1553 = vmatpush2.msra.mxu0 0.0
    %1554 = vmatprep.mubr.f32.mxu0 0.0
    %1555 = vmatmul.mubr.f32.gmra.mxu0 %v1488
    %v1556 = vpop.f32.mrf.mxu0
    %v1557 = vadd.f32 0.0, %v1556
    %v1558 = vpop.f32.mrf.mxu0
    %1559 = vdwg.mxu0
    %v1561 = vsel %vm184, %v1317, 0
    %1563 = vmatprep.subr.mxu0 0.0
    %1564 = vmatpush1.msra.mxu0 0.0
    %1565 = vmatprep.subr.mxu0 0.0
    %1566 = vmatpush1.msra.mxu0 0.0
    %1567 = vmatprep.subr.mxu0 0.0
    %1568 = vmatpush1.msra.mxu0 0.0
    %1569 = vmatprep.subr.mxu0 0.0
    %1570 = vmatpush1.msra.mxu0 0.0
    %1571 = vmatprep.subr.mxu0 0.0
    %1572 = vmatpush1.msra.mxu0 0.0
    %1573 = vmatprep.subr.mxu0 0.0
    %1574 = vmatpush1.msra.mxu0 0.0
    %1575 = vmatprep.subr.mxu0 0.0
    %1576 = vmatpush1.msra.mxu0 0.0
    %1577 = vmatprep.subr.mxu0 0.0
    %1578 = vmatpush1.msra.mxu0 0.0
    %1579 = vmatprep.subr.mxu0 0.0
    %1580 = vmatpush1.msra.mxu0 0.0
    %1581 = vmatprep.subr.mxu0 0.0
    %1582 = vmatpush1.msra.mxu0 0.0
    %1583 = vmatprep.subr.mxu0 0.0
    %1584 = vmatpush1.msra.mxu0 0.0
    %1585 = vmatprep.subr.mxu0 0.0
    %1586 = vmatpush1.msra.mxu0 0.0
    %1587 = vmatprep.subr.mxu0 0.0
    %1588 = vmatpush1.msra.mxu0 0.0
    %1589 = vmatprep.subr.mxu0 0.0
    %1590 = vmatpush1.msra.mxu0 0.0
    %1591 = vmatprep.subr.mxu0 0.0
    %1592 = vmatpush1.msra.mxu0 0.0
    %1593 = vmatprep.subr.mxu0 0.0
    %1594 = vmatpush1.msra.mxu0 %v176
    %1595 = vmatprep.subr.mxu0 0.0
    %1596 = vmatpush2.msra.mxu0 0.0
    %1597 = vmatprep.subr.mxu0 0.0
    %1598 = vmatpush2.msra.mxu0 0.0
    %1599 = vmatprep.subr.mxu0 0.0
    %1600 = vmatpush2.msra.mxu0 0.0
    %1601 = vmatprep.subr.mxu0 0.0
    %1602 = vmatpush2.msra.mxu0 0.0
    %1603 = vmatprep.subr.mxu0 0.0
    %1604 = vmatpush2.msra.mxu0 0.0
    %1605 = vmatprep.subr.mxu0 0.0
    %1606 = vmatpush2.msra.mxu0 0.0
    %1607 = vmatprep.subr.mxu0 0.0
    %1608 = vmatpush2.msra.mxu0 0.0
    %1609 = vmatprep.subr.mxu0 0.0
    %1610 = vmatpush2.msra.mxu0 0.0
    %1611 = vmatprep.subr.mxu0 0.0
    %1612 = vmatpush2.msra.mxu0 0.0
    %1613 = vmatprep.subr.mxu0 0.0
    %1614 = vmatpush2.msra.mxu0 0.0
    %1615 = vmatprep.subr.mxu0 0.0
    %1616 = vmatpush2.msra.mxu0 0.0
    %1617 = vmatprep.subr.mxu0 0.0
    %1618 = vmatpush2.msra.mxu0 0.0
    %1619 = vmatprep.subr.mxu0 0.0
    %1620 = vmatpush2.msra.mxu0 0.0
    %1621 = vmatprep.subr.mxu0 0.0
    %1622 = vmatpush2.msra.mxu0 0.0
    %1623 = vmatprep.subr.mxu0 0.0
    %1624 = vmatpush2.msra.mxu0 0.0
    %1625 = vmatprep.subr.mxu0 0.0
    %1626 = vmatpush2.msra.mxu0 0.0
    %1627 = vmatprep.mubr.f32.mxu0 0.0
    %1628 = vmatmul.mubr.f32.gmra.mxu0 %v1561
    %v1629 = vpop.f32.mrf.mxu0
    %v1630 = vadd.f32 %v1557, %v1629
    %v1631 = vpop.f32.mrf.mxu0
    %1632 = vdwg.mxu0
    %1633 = vrot.lane.b32.xlu0 %v173, 112
    %v1634 = vpop.permute.xlu0 %1633
    %1635 = vrot.lane.b32.xlu0 %v173, 80
    %v1636 = vpop.permute.xlu0 %1635
    %v1637 = vsel %vm184, %v1634, 0
    %v1639 = vsel %vm184, %v1636, 0
    %1641 = vmatprep.subr.mxu0 0.0
    %1642 = vmatpush1.xpose.msra.mxu0 0.0
    %1643 = vmatprep.subr.mxu0 0.0
    %1644 = vmatpush1.xpose.msra.mxu0 0.0
    %1645 = vmatprep.subr.mxu0 0.0
    %1646 = vmatpush1.xpose.msra.mxu0 0.0
    %1647 = vmatprep.subr.mxu0 0.0
    %1648 = vmatpush1.xpose.msra.mxu0 0.0
    %1649 = vmatprep.subr.mxu0 0.0
    %1650 = vmatpush1.xpose.msra.mxu0 0.0
    %1651 = vmatprep.subr.mxu0 0.0
    %1652 = vmatpush1.xpose.msra.mxu0 0.0
    %1653 = vmatprep.subr.mxu0 0.0
    %1654 = vmatpush1.xpose.msra.mxu0 0.0
    %1655 = vmatprep.subr.mxu0 0.0
    %1656 = vmatpush1.xpose.msra.mxu0 0.0
    %1657 = vmatprep.subr.mxu0 0.0
    %1658 = vmatpush1.xpose.msra.mxu0 0.0
    %1659 = vmatprep.subr.mxu0 0.0
    %1660 = vmatpush1.xpose.msra.mxu0 0.0
    %1661 = vmatprep.subr.mxu0 0.0
    %1662 = vmatpush1.xpose.msra.mxu0 0.0
    %1663 = vmatprep.subr.mxu0 0.0
    %1664 = vmatpush1.xpose.msra.mxu0 0.0
    %1665 = vmatprep.subr.mxu0 0.0
    %1666 = vmatpush1.xpose.msra.mxu0 0.0
    %1667 = vmatprep.subr.mxu0 0.0
    %1668 = vmatpush1.xpose.msra.mxu0 0.0
    %1669 = vmatprep.subr.mxu0 0.0
    %1670 = vmatpush1.xpose.msra.mxu0 0.0
    %1671 = vmatprep.subr.mxu0 0.0
    %1672 = vmatpush1.xpose.msra.mxu0 %v1639
    %1673 = vmatprep.subr.mxu0 0.0
    %1674 = vmatpush2.xpose.msra.mxu0 0.0
    %1675 = vmatprep.subr.mxu0 0.0
    %1676 = vmatpush2.xpose.msra.mxu0 0.0
    %1677 = vmatprep.subr.mxu0 0.0
    %1678 = vmatpush2.xpose.msra.mxu0 0.0
    %1679 = vmatprep.subr.mxu0 0.0
    %1680 = vmatpush2.xpose.msra.mxu0 0.0
    %1681 = vmatprep.subr.mxu0 0.0
    %1682 = vmatpush2.xpose.msra.mxu0 0.0
    %1683 = vmatprep.subr.mxu0 0.0
    %1684 = vmatpush2.xpose.msra.mxu0 0.0
    %1685 = vmatprep.subr.mxu0 0.0
    %1686 = vmatpush2.xpose.msra.mxu0 0.0
    %1687 = vmatprep.subr.mxu0 0.0
    %1688 = vmatpush2.xpose.msra.mxu0 0.0
    %1689 = vmatprep.subr.mxu0 0.0
    %1690 = vmatpush2.xpose.msra.mxu0 0.0
    %1691 = vmatprep.subr.mxu0 0.0
    %1692 = vmatpush2.xpose.msra.mxu0 0.0
    %1693 = vmatprep.subr.mxu0 0.0
    %1694 = vmatpush2.xpose.msra.mxu0 0.0
    %1695 = vmatprep.subr.mxu0 0.0
    %1696 = vmatpush2.xpose.msra.mxu0 0.0
    %1697 = vmatprep.subr.mxu0 0.0
    %1698 = vmatpush2.xpose.msra.mxu0 0.0
    %1699 = vmatprep.subr.mxu0 0.0
    %1700 = vmatpush2.xpose.msra.mxu0 0.0
    %1701 = vmatprep.subr.mxu0 0.0
    %1702 = vmatpush2.xpose.msra.mxu0 0.0
    %1703 = vmatprep.subr.mxu0 0.0
    %1704 = vmatpush2.xpose.msra.mxu0 0.0
    %1705 = vmatprep.mubr.f32.mxu0 0.0
    %1706 = vmatmul.mubr.f32.gmra.mxu0 %v1637
    %v1707 = vpop.f32.mrf.mxu0
    %v1708 = vadd.f32 0.0, %v1707
    %v1709 = vpop.f32.mrf.mxu0
    %1710 = vdwg.mxu0
    %v1711 = vmul.f32 %v1708, 0.35355338
    %v1712 = vsel %vm1231, -1e+09, %v1711
    %v1713 = vsel %vm184, %v1712, -inf
    %1714 = vmax.xlane.f32.xlu0 %v1713
    %v1715 = vpop.xlane.xlu0 %1714
    %v1716 = vsub.f32 %v1712, %v1715
    %v1717 = vmul.f32 %v1716, 1.442695
    %v1718 = vpow.pop %v1717
    %v1719 = vsel %vm184, %v1718, 0.0
    %1720 = vadd.xlane.f32.xlu0 %v1719
    %v1721 = vpop.xlane.xlu0 %1720
    %v1722 = vrcp.pop %v1721
    %v1723 = vmul.f32 %v1718, %v1722
    %1724 = vrot.lane.b32.xlu0 %v173, 48
    %v1725 = vpop.permute.xlu0 %1724
    %v1728 = vsel %vm184, %v1723, 0
    %1730 = vmatprep.subr.mxu0 0.0
    %1731 = vmatpush1.msra.mxu0 0.0
    %1732 = vmatprep.subr.mxu0 0.0
    %1733 = vmatpush1.msra.mxu0 0.0
    %1734 = vmatprep.subr.mxu0 0.0
    %1735 = vmatpush1.msra.mxu0 0.0
    %1736 = vmatprep.subr.mxu0 0.0
    %1737 = vmatpush1.msra.mxu0 0.0
    %1738 = vmatprep.subr.mxu0 0.0
    %1739 = vmatpush1.msra.mxu0 0.0
    %1740 = vmatprep.subr.mxu0 0.0
    %1741 = vmatpush1.msra.mxu0 0.0
    %1742 = vmatprep.subr.mxu0 0.0
    %1743 = vmatpush1.msra.mxu0 0.0
    %1744 = vmatprep.subr.mxu0 0.0
    %1745 = vmatpush1.msra.mxu0 0.0
    %1746 = vmatprep.subr.mxu0 0.0
    %1747 = vmatpush1.msra.mxu0 0.0
    %1748 = vmatprep.subr.mxu0 0.0
    %1749 = vmatpush1.msra.mxu0 0.0
    %1750 = vmatprep.subr.mxu0 0.0
    %1751 = vmatpush1.msra.mxu0 0.0
    %1752 = vmatprep.subr.mxu0 0.0
    %1753 = vmatpush1.msra.mxu0 0.0
    %1754 = vmatprep.subr.mxu0 0.0
    %1755 = vmatpush1.msra.mxu0 0.0
    %1756 = vmatprep.subr.mxu0 0.0
    %1757 = vmatpush1.msra.mxu0 0.0
    %1758 = vmatprep.subr.mxu0 0.0
    %1759 = vmatpush1.msra.mxu0 0.0
    %1760 = vmatprep.subr.mxu0 0.0
    %1761 = vmatpush1.msra.mxu0 %v1725
    %1762 = vmatprep.subr.mxu0 0.0
    %1763 = vmatpush2.msra.mxu0 0.0
    %1764 = vmatprep.subr.mxu0 0.0
    %1765 = vmatpush2.msra.mxu0 0.0
    %1766 = vmatprep.subr.mxu0 0.0
    %1767 = vmatpush2.msra.mxu0 0.0
    %1768 = vmatprep.subr.mxu0 0.0
    %1769 = vmatpush2.msra.mxu0 0.0
    %1770 = vmatprep.subr.mxu0 0.0
    %1771 = vmatpush2.msra.mxu0 0.0
    %1772 = vmatprep.subr.mxu0 0.0
    %1773 = vmatpush2.msra.mxu0 0.0
    %1774 = vmatprep.subr.mxu0 0.0
    %1775 = vmatpush2.msra.mxu0 0.0
    %1776 = vmatprep.subr.mxu0 0.0
    %1777 = vmatpush2.msra.mxu0 0.0
    %1778 = vmatprep.subr.mxu0 0.0
    %1779 = vmatpush2.msra.mxu0 0.0
    %1780 = vmatprep.subr.mxu0 0.0
    %1781 = vmatpush2.msra.mxu0 0.0
    %1782 = vmatprep.subr.mxu0 0.0
    %1783 = vmatpush2.msra.mxu0 0.0
    %1784 = vmatprep.subr.mxu0 0.0
    %1785 = vmatpush2.msra.mxu0 0.0
    %1786 = vmatprep.subr.mxu0 0.0
    %1787 = vmatpush2.msra.mxu0 0.0
    %1788 = vmatprep.subr.mxu0 0.0
    %1789 = vmatpush2.msra.mxu0 0.0
    %1790 = vmatprep.subr.mxu0 0.0
    %1791 = vmatpush2.msra.mxu0 0.0
    %1792 = vmatprep.subr.mxu0 0.0
    %1793 = vmatpush2.msra.mxu0 0.0
    %1794 = vmatprep.mubr.f32.mxu0 0.0
    %1795 = vmatmul.mubr.f32.gmra.mxu0 %v1728
    %v1796 = vpop.f32.mrf.mxu0
    %v1797 = vadd.f32 0.0, %v1796
    %v1798 = vpop.f32.mrf.mxu0
    %1799 = vdwg.mxu0
    %v1801 = vsel %vm184, %v1797, 0
    %1803 = vmatprep.subr.mxu0 0.0
    %1804 = vmatpush1.msra.mxu0 0.0
    %1805 = vmatprep.subr.mxu0 0.0
    %1806 = vmatpush1.msra.mxu0 0.0
    %1807 = vmatprep.subr.mxu0 0.0
    %1808 = vmatpush1.msra.mxu0 0.0
    %1809 = vmatprep.subr.mxu0 0.0
    %1810 = vmatpush1.msra.mxu0 0.0
    %1811 = vmatprep.subr.mxu0 0.0
    %1812 = vmatpush1.msra.mxu0 0.0
    %1813 = vmatprep.subr.mxu0 0.0
    %1814 = vmatpush1.msra.mxu0 0.0
    %1815 = vmatprep.subr.mxu0 0.0
    %1816 = vmatpush1.msra.mxu0 0.0
    %1817 = vmatprep.subr.mxu0 0.0
    %1818 = vmatpush1.msra.mxu0 0.0
    %1819 = vmatprep.subr.mxu0 0.0
    %1820 = vmatpush1.msra.mxu0 0.0
    %1821 = vmatprep.subr.mxu0 0.0
    %1822 = vmatpush1.msra.mxu0 0.0
    %1823 = vmatprep.subr.mxu0 0.0
    %1824 = vmatpush1.msra.mxu0 0.0
    %1825 = vmatprep.subr.mxu0 0.0
    %1826 = vmatpush1.msra.mxu0 0.0
    %1827 = vmatprep.subr.mxu0 0.0
    %1828 = vmatpush1.msra.mxu0 0.0
    %1829 = vmatprep.subr.mxu0 0.0
    %1830 = vmatpush1.msra.mxu0 0.0
    %1831 = vmatprep.subr.mxu0 0.0
    %1832 = vmatpush1.msra.mxu0 0.0
    %1833 = vmatprep.subr.mxu0 0.0
    %1834 = vmatpush1.msra.mxu0 %v178
    %1835 = vmatprep.subr.mxu0 0.0
    %1836 = vmatpush2.msra.mxu0 0.0
    %1837 = vmatprep.subr.mxu0 0.0
    %1838 = vmatpush2.msra.mxu0 0.0
    %1839 = vmatprep.subr.mxu0 0.0
    %1840 = vmatpush2.msra.mxu0 0.0
    %1841 = vmatprep.subr.mxu0 0.0
    %1842 = vmatpush2.msra.mxu0 0.0
    %1843 = vmatprep.subr.mxu0 0.0
    %1844 = vmatpush2.msra.mxu0 0.0
    %1845 = vmatprep.subr.mxu0 0.0
    %1846 = vmatpush2.msra.mxu0 0.0
    %1847 = vmatprep.subr.mxu0 0.0
    %1848 = vmatpush2.msra.mxu0 0.0
    %1849 = vmatprep.subr.mxu0 0.0
    %1850 = vmatpush2.msra.mxu0 0.0
    %1851 = vmatprep.subr.mxu0 0.0
    %1852 = vmatpush2.msra.mxu0 0.0
    %1853 = vmatprep.subr.mxu0 0.0
    %1854 = vmatpush2.msra.mxu0 0.0
    %1855 = vmatprep.subr.mxu0 0.0
    %1856 = vmatpush2.msra.mxu0 0.0
    %1857 = vmatprep.subr.mxu0 0.0
    %1858 = vmatpush2.msra.mxu0 0.0
    %1859 = vmatprep.subr.mxu0 0.0
    %1860 = vmatpush2.msra.mxu0 0.0
    %1861 = vmatprep.subr.mxu0 0.0
    %1862 = vmatpush2.msra.mxu0 0.0
    %1863 = vmatprep.subr.mxu0 0.0
    %1864 = vmatpush2.msra.mxu0 0.0
    %1865 = vmatprep.subr.mxu0 0.0
    %1866 = vmatpush2.msra.mxu0 0.0
    %1867 = vmatprep.mubr.f32.mxu0 0.0
    %1868 = vmatmul.mubr.f32.gmra.mxu0 %v1801
    %v1869 = vpop.f32.mrf.mxu0
    %v1870 = vadd.f32 0.0, %v1869
    %v1871 = vpop.f32.mrf.mxu0
    %1872 = vdwg.mxu0
    %v1873 = vadd.f32 %v1630, %v1870
    %1874 = vrot.lane.b32.xlu0 %v173, 104
    %v1875 = vpop.permute.xlu0 %1874
    %1876 = vrot.lane.b32.xlu0 %v173, 72
    %v1877 = vpop.permute.xlu0 %1876
    %v1878 = vsel %vm184, %v1875, 0
    %v1880 = vsel %vm184, %v1877, 0
    %1882 = vmatprep.subr.mxu0 0.0
    %1883 = vmatpush1.xpose.msra.mxu0 0.0
    %1884 = vmatprep.subr.mxu0 0.0
    %1885 = vmatpush1.xpose.msra.mxu0 0.0
    %1886 = vmatprep.subr.mxu0 0.0
    %1887 = vmatpush1.xpose.msra.mxu0 0.0
    %1888 = vmatprep.subr.mxu0 0.0
    %1889 = vmatpush1.xpose.msra.mxu0 0.0
    %1890 = vmatprep.subr.mxu0 0.0
    %1891 = vmatpush1.xpose.msra.mxu0 0.0
    %1892 = vmatprep.subr.mxu0 0.0
    %1893 = vmatpush1.xpose.msra.mxu0 0.0
    %1894 = vmatprep.subr.mxu0 0.0
    %1895 = vmatpush1.xpose.msra.mxu0 0.0
    %1896 = vmatprep.subr.mxu0 0.0
    %1897 = vmatpush1.xpose.msra.mxu0 0.0
    %1898 = vmatprep.subr.mxu0 0.0
    %1899 = vmatpush1.xpose.msra.mxu0 0.0
    %1900 = vmatprep.subr.mxu0 0.0
    %1901 = vmatpush1.xpose.msra.mxu0 0.0
    %1902 = vmatprep.subr.mxu0 0.0
    %1903 = vmatpush1.xpose.msra.mxu0 0.0
    %1904 = vmatprep.subr.mxu0 0.0
    %1905 = vmatpush1.xpose.msra.mxu0 0.0
    %1906 = vmatprep.subr.mxu0 0.0
    %1907 = vmatpush1.xpose.msra.mxu0 0.0
    %1908 = vmatprep.subr.mxu0 0.0
    %1909 = vmatpush1.xpose.msra.mxu0 0.0
    %1910 = vmatprep.subr.mxu0 0.0
    %1911 = vmatpush1.xpose.msra.mxu0 0.0
    %1912 = vmatprep.subr.mxu0 0.0
    %1913 = vmatpush1.xpose.msra.mxu0 %v1880
    %1914 = vmatprep.subr.mxu0 0.0
    %1915 = vmatpush2.xpose.msra.mxu0 0.0
    %1916 = vmatprep.subr.mxu0 0.0
    %1917 = vmatpush2.xpose.msra.mxu0 0.0
    %1918 = vmatprep.subr.mxu0 0.0
    %1919 = vmatpush2.xpose.msra.mxu0 0.0
    %1920 = vmatprep.subr.mxu0 0.0
    %1921 = vmatpush2.xpose.msra.mxu0 0.0
    %1922 = vmatprep.subr.mxu0 0.0
    %1923 = vmatpush2.xpose.msra.mxu0 0.0
    %1924 = vmatprep.subr.mxu0 0.0
    %1925 = vmatpush2.xpose.msra.mxu0 0.0
    %1926 = vmatprep.subr.mxu0 0.0
    %1927 = vmatpush2.xpose.msra.mxu0 0.0
    %1928 = vmatprep.subr.mxu0 0.0
    %1929 = vmatpush2.xpose.msra.mxu0 0.0
    %1930 = vmatprep.subr.mxu0 0.0
    %1931 = vmatpush2.xpose.msra.mxu0 0.0
    %1932 = vmatprep.subr.mxu0 0.0
    %1933 = vmatpush2.xpose.msra.mxu0 0.0
    %1934 = vmatprep.subr.mxu0 0.0
    %1935 = vmatpush2.xpose.msra.mxu0 0.0
    %1936 = vmatprep.subr.mxu0 0.0
    %1937 = vmatpush2.xpose.msra.mxu0 0.0
    %1938 = vmatprep.subr.mxu0 0.0
    %1939 = vmatpush2.xpose.msra.mxu0 0.0
    %1940 = vmatprep.subr.mxu0 0.0
    %1941 = vmatpush2.xpose.msra.mxu0 0.0
    %1942 = vmatprep.subr.mxu0 0.0
    %1943 = vmatpush2.xpose.msra.mxu0 0.0
    %1944 = vmatprep.subr.mxu0 0.0
    %1945 = vmatpush2.xpose.msra.mxu0 0.0
    %1946 = vmatprep.mubr.f32.mxu0 0.0
    %1947 = vmatmul.mubr.f32.gmra.mxu0 %v1878
    %v1948 = vpop.f32.mrf.mxu0
    %v1949 = vadd.f32 0.0, %v1948
    %v1950 = vpop.f32.mrf.mxu0
    %1951 = vdwg.mxu0
    %v1952 = vmul.f32 %v1949, 0.35355338
    %v1953 = vsel %vm1231, -1e+09, %v1952
    %v1954 = vsel %vm184, %v1953, -inf
    %1955 = vmax.xlane.f32.xlu0 %v1954
    %v1956 = vpop.xlane.xlu0 %1955
    %v1957 = vsub.f32 %v1953, %v1956
    %v1958 = vmul.f32 %v1957, 1.442695
    %v1959 = vpow.pop %v1958
    %v1960 = vsel %vm184, %v1959, 0.0
    %1961 = vadd.xlane.f32.xlu0 %v1960
    %v1962 = vpop.xlane.xlu0 %1961
    %v1963 = vrcp.pop %v1962
    %v1964 = vmul.f32 %v1959, %v1963
    %1965 = vrot.lane.b32.xlu0 %v173, 40
    %v1966 = vpop.permute.xlu0 %1965
    %v1969 = vsel %vm184, %v1964, 0
    %1971 = vmatprep.subr.mxu0 0.0
    %1972 = vmatpush1.msra.mxu0 0.0
    %1973 = vmatprep.subr.mxu0 0.0
    %1974 = vmatpush1.msra.mxu0 0.0
    %1975 = vmatprep.subr.mxu0 0.0
    %1976 = vmatpush1.msra.mxu0 0.0
    %1977 = vmatprep.subr.mxu0 0.0
    %1978 = vmatpush1.msra.mxu0 0.0
    %1979 = vmatprep.subr.mxu0 0.0
    %1980 = vmatpush1.msra.mxu0 0.0
    %1981 = vmatprep.subr.mxu0 0.0
    %1982 = vmatpush1.msra.mxu0 0.0
    %1983 = vmatprep.subr.mxu0 0.0
    %1984 = vmatpush1.msra.mxu0 0.0
    %1985 = vmatprep.subr.mxu0 0.0
    %1986 = vmatpush1.msra.mxu0 0.0
    %1987 = vmatprep.subr.mxu0 0.0
    %1988 = vmatpush1.msra.mxu0 0.0
    %1989 = vmatprep.subr.mxu0 0.0
    %1990 = vmatpush1.msra.mxu0 0.0
    %1991 = vmatprep.subr.mxu0 0.0
    %1992 = vmatpush1.msra.mxu0 0.0
    %1993 = vmatprep.subr.mxu0 0.0
    %1994 = vmatpush1.msra.mxu0 0.0
    %1995 = vmatprep.subr.mxu0 0.0
    %1996 = vmatpush1.msra.mxu0 0.0
    %1997 = vmatprep.subr.mxu0 0.0
    %1998 = vmatpush1.msra.mxu0 0.0
    %1999 = vmatprep.subr.mxu0 0.0
    %2000 = vmatpush1.msra.mxu0 0.0
    %2001 = vmatprep.subr.mxu0 0.0
    %2002 = vmatpush1.msra.mxu0 %v1966
    %2003 = vmatprep.subr.mxu0 0.0
    %2004 = vmatpush2.msra.mxu0 0.0
    %2005 = vmatprep.subr.mxu0 0.0
    %2006 = vmatpush2.msra.mxu0 0.0
    %2007 = vmatprep.subr.mxu0 0.0
    %2008 = vmatpush2.msra.mxu0 0.0
    %2009 = vmatprep.subr.mxu0 0.0
    %2010 = vmatpush2.msra.mxu0 0.0
    %2011 = vmatprep.subr.mxu0 0.0
    %2012 = vmatpush2.msra.mxu0 0.0
    %2013 = vmatprep.subr.mxu0 0.0
    %2014 = vmatpush2.msra.mxu0 0.0
    %2015 = vmatprep.subr.mxu0 0.0
    %2016 = vmatpush2.msra.mxu0 0.0
    %2017 = vmatprep.subr.mxu0 0.0
    %2018 = vmatpush2.msra.mxu0 0.0
    %2019 = vmatprep.subr.mxu0 0.0
    %2020 = vmatpush2.msra.mxu0 0.0
    %2021 = vmatprep.subr.mxu0 0.0
    %2022 = vmatpush2.msra.mxu0 0.0
    %2023 = vmatprep.subr.mxu0 0.0
    %2024 = vmatpush2.msra.mxu0 0.0
    %2025 = vmatprep.subr.mxu0 0.0
    %2026 = vmatpush2.msra.mxu0 0.0
    %2027 = vmatprep.subr.mxu0 0.0
    %2028 = vmatpush2.msra.mxu0 0.0
    %2029 = vmatprep.subr.mxu0 0.0
    %2030 = vmatpush2.msra.mxu0 0.0
    %2031 = vmatprep.subr.mxu0 0.0
    %2032 = vmatpush2.msra.mxu0 0.0
    %2033 = vmatprep.subr.mxu0 0.0
    %2034 = vmatpush2.msra.mxu0 0.0
    %2035 = vmatprep.mubr.f32.mxu0 0.0
    %2036 = vmatmul.mubr.f32.gmra.mxu0 %v1969
    %v2037 = vpop.f32.mrf.mxu0
    %v2038 = vadd.f32 0.0, %v2037
    %v2039 = vpop.f32.mrf.mxu0
    %2040 = vdwg.mxu0
    %v2042 = vsel %vm184, %v2038, 0
    %2044 = vmatprep.subr.mxu0 0.0
    %2045 = vmatpush1.msra.mxu0 0.0
    %2046 = vmatprep.subr.mxu0 0.0
    %2047 = vmatpush1.msra.mxu0 0.0
    %2048 = vmatprep.subr.mxu0 0.0
    %2049 = vmatpush1.msra.mxu0 0.0
    %2050 = vmatprep.subr.mxu0 0.0
    %2051 = vmatpush1.msra.mxu0 0.0
    %2052 = vmatprep.subr.mxu0 0.0
    %2053 = vmatpush1.msra.mxu0 0.0
    %2054 = vmatprep.subr.mxu0 0.0
    %2055 = vmatpush1.msra.mxu0 0.0
    %2056 = vmatprep.subr.mxu0 0.0
    %2057 = vmatpush1.msra.mxu0 0.0
    %2058 = vmatprep.subr.mxu0 0.0
    %2059 = vmatpush1.msra.mxu0 0.0
    %2060 = vmatprep.subr.mxu0 0.0
    %2061 = vmatpush1.msra.mxu0 0.0
    %2062 = vmatprep.subr.mxu0 0.0
    %2063 = vmatpush1.msra.mxu0 0.0
    %2064 = vmatprep.subr.mxu0 0.0
    %2065 = vmatpush1.msra.mxu0 0.0
    %2066 = vmatprep.subr.mxu0 0.0
    %2067 = vmatpush1.msra.mxu0 0.0
    %2068 = vmatprep.subr.mxu0 0.0
    %2069 = vmatpush1.msra.mxu0 0.0
    %2070 = vmatprep.subr.mxu0 0.0
    %2071 = vmatpush1.msra.mxu0 0.0
    %2072 = vmatprep.subr.mxu0 0.0
    %2073 = vmatpush1.msra.mxu0 0.0
    %2074 = vmatprep.subr.mxu0 0.0
    %2075 = vmatpush1.msra.mxu0 %v179
    %2076 = vmatprep.subr.mxu0 0.0
    %2077 = vmatpush2.msra.mxu0 0.0
    %2078 = vmatprep.subr.mxu0 0.0
    %2079 = vmatpush2.msra.mxu0 0.0
    %2080 = vmatprep.subr.mxu0 0.0
    %2081 = vmatpush2.msra.mxu0 0.0
    %2082 = vmatprep.subr.mxu0 0.0
    %2083 = vmatpush2.msra.mxu0 0.0
    %2084 = vmatprep.subr.mxu0 0.0
    %2085 = vmatpush2.msra.mxu0 0.0
    %2086 = vmatprep.subr.mxu0 0.0
    %2087 = vmatpush2.msra.mxu0 0.0
    %2088 = vmatprep.subr.mxu0 0.0
    %2089 = vmatpush2.msra.mxu0 0.0
    %2090 = vmatprep.subr.mxu0 0.0
    %2091 = vmatpush2.msra.mxu0 0.0
    %2092 = vmatprep.subr.mxu0 0.0
    %2093 = vmatpush2.msra.mxu0 0.0
    %2094 = vmatprep.subr.mxu0 0.0
    %2095 = vmatpush2.msra.mxu0 0.0
    %2096 = vmatprep.subr.mxu0 0.0
    %2097 = vmatpush2.msra.mxu0 0.0
    %2098 = vmatprep.subr.mxu0 0.0
    %2099 = vmatpush2.msra.mxu0 0.0
    %2100 = vmatprep.subr.mxu0 0.0
    %2101 = vmatpush2.msra.mxu0 0.0
    %2102 = vmatprep.subr.mxu0 0.0
    %2103 = vmatpush2.msra.mxu0 0.0
    %2104 = vmatprep.subr.mxu0 0.0
    %2105 = vmatpush2.msra.mxu0 0.0
    %2106 = vmatprep.subr.mxu0 0.0
    %2107 = vmatpush2.msra.mxu0 0.0
    %2108 = vmatprep.mubr.f32.mxu0 0.0
    %2109 = vmatmul.mubr.f32.gmra.mxu0 %v2042
    %v2110 = vpop.f32.mrf.mxu0
    %v2111 = vadd.f32 0.0, %v2110
    %v2112 = vpop.f32.mrf.mxu0
    %2113 = vdwg.mxu0
    %v2114 = vadd.f32 %v1873, %v2111
    %v2115 = vlaneseq
    %v2116 = vshrl.u32 %v2115, 7
    %v2117 = vsub.s32 5, %v2116
    %v2118 = vrot.slane %v31, %v2117
    %v2119 = vadd.f32 %v1147, %v2118
    %v2120 = vadd.f32 %v2114, %v2118
    %v2121 = vadd.f32 %v27, %v2119
    %v2122 = vadd.f32 %v28, %v2120
    %v2123 = vsel %vm32, %v2121, 0.0
    %2124 = vadd.xlane.f32.xlu0 %v2123
    %v2125 = vpop.xlane.xlu0 %2124
    %v2126 = vsel %vm32, %v2122, 0.0
    %2127 = vadd.xlane.f32.xlu0 %v2126
    %v2128 = vpop.xlane.xlu0 %2127
    %v2129 = vmul.f32 %v2125, %v39
    %v2130 = vmul.f32 %v2128, %v39
    %v2131 = vsub.f32 %v2121, %v2129
    %v2132 = vsub.f32 %v2122, %v2130
    %v2133 = vmul.f32 %v2131, %v2131
    %v2134 = vmul.f32 %v2132, %v2132
    %v2135 = vsel %vm32, %v2133, 0.0
    %2136 = vadd.xlane.f32.xlu0 %v2135
    %v2137 = vpop.xlane.xlu0 %2136
    %v2138 = vsel %vm32, %v2134, 0.0
    %2139 = vadd.xlane.f32.xlu0 %v2138
    %v2140 = vpop.xlane.xlu0 %2139
    %v2141 = vmul.f32 %v2137, %v52
    %v2142 = vmul.f32 %v2140, %v52
    %v2143 = vrsqrt.pop %v2141
    %v2144 = vmul.f32 %v2141, %v2143
    %vm2145 = vcmp.eq.f32.partialorder %v2141, inf
    %v2146 = vsel %vm2145, %v2141, %v2144
    %vm2147 = vcmp.eq.f32.partialorder %v2141, 0.0
    %v2148 = vand.u32 %v2141, 2147483648
    %v2149 = vsel %vm2147, %v2148, %v2146
    %v2150 = vrsqrt.pop %v2142
    %v2151 = vmul.f32 %v2142, %v2150
    %vm2152 = vcmp.eq.f32.partialorder %v2142, inf
    %v2153 = vsel %vm2152, %v2142, %v2151
    %vm2154 = vcmp.eq.f32.partialorder %v2142, 0.0
    %v2155 = vand.u32 %v2142, 2147483648
    %v2156 = vsel %vm2154, %v2155, %v2153
    %v2157 = vlaneseq
    %v2158 = vshrl.u32 %v2157, 7
    %v2159 = vsub.s32 2, %v2158
    %v2160 = vrot.slane %v31, %v2159
    %v2161 = vmul.f32 %v2160, %v2131
    %v2162 = vmul.f32 %v2160, %v2132
    %v2163 = vadd.f32 %v2149, 1e-06
    %v2164 = vadd.f32 %v2156, 1e-06
    %v2165 = vrcp.pop %v2163
    %v2166 = vmul.f32 %v2161, %v2165
    %v2167 = vrcp.pop %v2164
    %v2168 = vmul.f32 %v2162, %v2167
    %v2169 = vlaneseq
    %v2170 = vshrl.u32 %v2169, 7
    %v2171 = vsub.s32 3, %v2170
    %v2172 = vrot.slane %v31, %v2171
    %v2173 = vadd.f32 %v2166, %v2172
    %v2174 = vadd.f32 %v2168, %v2172
    %v2175 = vld [vmem:[%s4] sm:$0xff]
    %v2176 = vld [vmem:[%s4 + $0x8] sm:$0xff]
    %v2177 = vld [vmem:[%s4 + $0x10] sm:$0xff]
    %v2178 = vld [vmem:[%s4 + $0x18] sm:$0xff]
    %v2179 = vlaneseq
    %v2180 = vshrl.u32 %v2179, 7
    %v2181 = vsub.s32 6, %v2180
    %v2182 = vrot.slane %v31, %v2181
    %v2184 = vsel %vm32, %v2173, 0
    %v2187 = vsel %vm32, %v2174, 0
    %2189 = vmatprep.subr.mxu0 0.0
    %2190 = vmatpush1.msra.mxu0 0.0
    %2191 = vmatprep.subr.mxu0 0.0
    %2192 = vmatpush1.msra.mxu0 0.0
    %2193 = vmatprep.subr.mxu0 0.0
    %2194 = vmatpush1.msra.mxu0 0.0
    %2195 = vmatprep.subr.mxu0 0.0
    %2196 = vmatpush1.msra.mxu0 0.0
    %2197 = vmatprep.subr.mxu0 0.0
    %2198 = vmatpush1.msra.mxu0 0.0
    %2199 = vmatprep.subr.mxu0 0.0
    %2200 = vmatpush1.msra.mxu0 0.0
    %2201 = vmatprep.subr.mxu0 0.0
    %2202 = vmatpush1.msra.mxu0 0.0
    %2203 = vmatprep.subr.mxu0 0.0
    %2204 = vmatpush1.msra.mxu0 0.0
    %2205 = vmatprep.subr.mxu0 0.0
    %2206 = vmatpush1.msra.mxu0 0.0
    %2207 = vmatprep.subr.mxu0 0.0
    %2208 = vmatpush1.msra.mxu0 0.0
    %2209 = vmatprep.subr.mxu0 0.0
    %2210 = vmatpush1.msra.mxu0 0.0
    %2211 = vmatprep.subr.mxu0 0.0
    %2212 = vmatpush1.msra.mxu0 0.0
    %2213 = vmatprep.subr.mxu0 0.0
    %2214 = vmatpush1.msra.mxu0 %v2178
    %2215 = vmatprep.subr.mxu0 0.0
    %2216 = vmatpush1.msra.mxu0 %v2177
    %2217 = vmatprep.subr.mxu0 0.0
    %2218 = vmatpush1.msra.mxu0 %v2176
    %2219 = vmatprep.subr.mxu0 0.0
    %2220 = vmatpush1.msra.mxu0 %v2175
    %2221 = vmatprep.subr.mxu0 0.0
    %2222 = vmatpush2.msra.mxu0 0.0
    %2223 = vmatprep.subr.mxu0 0.0
    %2224 = vmatpush2.msra.mxu0 0.0
    %2225 = vmatprep.subr.mxu0 0.0
    %2226 = vmatpush2.msra.mxu0 0.0
    %2227 = vmatprep.subr.mxu0 0.0
    %2228 = vmatpush2.msra.mxu0 0.0
    %2229 = vmatprep.subr.mxu0 0.0
    %2230 = vmatpush2.msra.mxu0 0.0
    %2231 = vmatprep.subr.mxu0 0.0
    %2232 = vmatpush2.msra.mxu0 0.0
    %2233 = vmatprep.subr.mxu0 0.0
    %2234 = vmatpush2.msra.mxu0 0.0
    %2235 = vmatprep.subr.mxu0 0.0
    %2236 = vmatpush2.msra.mxu0 0.0
    %2237 = vmatprep.subr.mxu0 0.0
    %2238 = vmatpush2.msra.mxu0 0.0
    %2239 = vmatprep.subr.mxu0 0.0
    %2240 = vmatpush2.msra.mxu0 0.0
    %2241 = vmatprep.subr.mxu0 0.0
    %2242 = vmatpush2.msra.mxu0 0.0
    %2243 = vmatprep.subr.mxu0 0.0
    %2244 = vmatpush2.msra.mxu0 0.0
    %2245 = vmatprep.subr.mxu0 0.0
    %2246 = vmatpush2.msra.mxu0 0.0
    %2247 = vmatprep.subr.mxu0 0.0
    %2248 = vmatpush2.msra.mxu0 0.0
    %2249 = vmatprep.subr.mxu0 0.0
    %2250 = vmatpush2.msra.mxu0 0.0
    %2251 = vmatprep.subr.mxu0 0.0
    %2252 = vmatpush2.msra.mxu0 0.0
    %2253 = vmatprep.mubr.f32.mxu0 0.0
    %2254 = vmatmul.mubr.f32.gmra.mxu0 %v2184
    %v2255 = vpop.f32.mrf.mxu0
    %v2256 = vadd.f32 %v2182, %v2255
    %v2257 = vpop.f32.mrf.mxu0
    %2258 = vmatprep.mubr.f32.mxu0 0.0
    %2259 = vmatmul.mubr.f32.gmra.mxu0 %v2187
    %v2260 = vpop.f32.mrf.mxu0
    %v2261 = vadd.f32 %v2182, %v2260
    %v2262 = vpop.f32.mrf.mxu0
    %2263 = vdwg.mxu0
    %v2264 = vmax.f32 %v2256, 0.0
    %v2265 = vmax.f32 %v2261, 0.0
    %v2266 = vld [vmem:[%s5] sm:$0xff]
    %v2267 = vld [vmem:[%s5 + $0x8] sm:$0xff]
    %v2268 = vld [vmem:[%s5 + $0x10] sm:$0xff]
    %v2269 = vld [vmem:[%s5 + $0x18] sm:$0xff]
    %v2270 = vld [vmem:[%s5 + $0x20] sm:$0xff]
    %v2271 = vld [vmem:[%s5 + $0x28] sm:$0xff]
    %v2272 = vld [vmem:[%s5 + $0x30] sm:$0xff]
    %v2273 = vld [vmem:[%s5 + $0x38] sm:$0xff]
    %v2274 = vlaneseq
    %v2275 = vshrl.u32 %v2274, 7
    %v2276 = vsub.s32 7, %v2275
    %v2277 = vrot.slane %v31, %v2276
    %vm2278 = vcmask 523264
    %v2280 = vsel %vm2278, %v2264, 0
    %v2283 = vsel %vm2278, %v2265, 0
    %2285 = vmatprep.subr.mxu0 0.0
    %2286 = vmatpush1.msra.mxu0 0.0
    %2287 = vmatprep.subr.mxu0 0.0
    %2288 = vmatpush1.msra.mxu0 0.0
    %2289 = vmatprep.subr.mxu0 0.0
    %2290 = vmatpush1.msra.mxu0 0.0
    %2291 = vmatprep.subr.mxu0 0.0
    %2292 = vmatpush1.msra.mxu0 0.0
    %2293 = vmatprep.subr.mxu0 0.0
    %2294 = vmatpush1.msra.mxu0 0.0
    %2295 = vmatprep.subr.mxu0 0.0
    %2296 = vmatpush1.msra.mxu0 0.0
    %2297 = vmatprep.subr.mxu0 0.0
    %2298 = vmatpush1.msra.mxu0 0.0
    %2299 = vmatprep.subr.mxu0 0.0
    %2300 = vmatpush1.msra.mxu0 0.0
    %2301 = vmatprep.subr.mxu0 0.0
    %2302 = vmatpush1.msra.mxu0 %v2273
    %2303 = vmatprep.subr.mxu0 0.0
    %2304 = vmatpush1.msra.mxu0 %v2272
    %2305 = vmatprep.subr.mxu0 0.0
    %2306 = vmatpush1.msra.mxu0 %v2271
    %2307 = vmatprep.subr.mxu0 0.0
    %2308 = vmatpush1.msra.mxu0 %v2270
    %2309 = vmatprep.subr.mxu0 0.0
    %2310 = vmatpush1.msra.mxu0 %v2269
    %2311 = vmatprep.subr.mxu0 0.0
    %2312 = vmatpush1.msra.mxu0 %v2268
    %2313 = vmatprep.subr.mxu0 0.0
    %2314 = vmatpush1.msra.mxu0 %v2267
    %2315 = vmatprep.subr.mxu0 0.0
    %2316 = vmatpush1.msra.mxu0 %v2266
    %2317 = vmatprep.subr.mxu0 0.0
    %2318 = vmatpush2.msra.mxu0 0.0
    %2319 = vmatprep.subr.mxu0 0.0
    %2320 = vmatpush2.msra.mxu0 0.0
    %2321 = vmatprep.subr.mxu0 0.0
    %2322 = vmatpush2.msra.mxu0 0.0
    %2323 = vmatprep.subr.mxu0 0.0
    %2324 = vmatpush2.msra.mxu0 0.0
    %2325 = vmatprep.subr.mxu0 0.0
    %2326 = vmatpush2.msra.mxu0 0.0
    %2327 = vmatprep.subr.mxu0 0.0
    %2328 = vmatpush2.msra.mxu0 0.0
    %2329 = vmatprep.subr.mxu0 0.0
    %2330 = vmatpush2.msra.mxu0 0.0
    %2331 = vmatprep.subr.mxu0 0.0
    %2332 = vmatpush2.msra.mxu0 0.0
    %2333 = vmatprep.subr.mxu0 0.0
    %2334 = vmatpush2.msra.mxu0 0.0
    %2335 = vmatprep.subr.mxu0 0.0
    %2336 = vmatpush2.msra.mxu0 0.0
    %2337 = vmatprep.subr.mxu0 0.0
    %2338 = vmatpush2.msra.mxu0 0.0
    %2339 = vmatprep.subr.mxu0 0.0
    %2340 = vmatpush2.msra.mxu0 0.0
    %2341 = vmatprep.subr.mxu0 0.0
    %2342 = vmatpush2.msra.mxu0 0.0
    %2343 = vmatprep.subr.mxu0 0.0
    %2344 = vmatpush2.msra.mxu0 0.0
    %2345 = vmatprep.subr.mxu0 0.0
    %2346 = vmatpush2.msra.mxu0 0.0
    %2347 = vmatprep.subr.mxu0 0.0
    %2348 = vmatpush2.msra.mxu0 0.0
    %2349 = vmatprep.mubr.f32.mxu0 0.0
    %2350 = vmatmul.mubr.f32.gmra.mxu0 %v2280
    %v2351 = vpop.f32.mrf.mxu0
    %v2352 = vadd.f32 %v2277, %v2351
    %v2353 = vpop.f32.mrf.mxu0
    %2354 = vmatprep.mubr.f32.mxu0 0.0
    %2355 = vmatmul.mubr.f32.gmra.mxu0 %v2283
    %v2356 = vpop.f32.mrf.mxu0
    %v2357 = vadd.f32 %v2277, %v2356
    %v2358 = vpop.f32.mrf.mxu0
    %2359 = vdwg.mxu0
    %v2360 = vadd.f32 %v2121, %v2352
    %v2361 = vadd.f32 %v2122, %v2357
    %2362 = vst.msk [vmem:[#allocation2] sm:$0xff] %vm32, %v2360
    %2363 = vst.msk [vmem:[#allocation2 + $0x8] sm:$0xff] %vm32, %v2361
    // Predicated region
    $region30: #{tpu_custom_call.1} parent=1 // pred_check
      _
    $region31: #{tpu_custom_call.1} parent=1 // pred_check_branch
      %2365 = sbr.rel (0) target = $region33
    $region32: #{tpu_custom_call.1} parent=1 // pred_region
      %s2367 = ssub.s32 256, 256
      %2368 = vsyncadd [#allocation3], %s2367
      %s2369 = sshll.u32 [#allocation2], 4
      %s2370 = int_to_ptr.vmem [resolvable:$true] %s2369
      %2375 = dma.vmem_to_hbm [thread:$0]  %s2370, 256, %s7, [#allocation3], 128, 128, 8
    $region33: #{tpu_custom_call.1} parent=1 // pred_fallthru
      _
    // Predicated region
    $region34: #{tpu_custom_call.1} parent=1 // pred_check
      _
    $region35: #{tpu_custom_call.1} parent=1 // pred_check_branch
      %2377 = sbr.rel (0) target = $region37
    $region36: #{tpu_custom_call.1} parent=1 // pred_region
      %2378 = dma.done [#allocation3], 256
    $region37: #{tpu_custom_call.1} parent=1 // pred_fallthru
      _
    %2379 = vsyncpa [#allocation3], 1

</llo_original>
